<compile_context>
chip_gen: v6e
topology: v6e:2x2x1
jax: 0.10.0
libtpu: 0.0.40
codegen_flags: <defaults>
</compile_context>

<pallas_src>
import functools

import jax
import jax.numpy as jnp
import numpy as np
from jax.experimental import pallas as pl
from jax.experimental.pallas import tpu as pltpu


# ----------------------------------------------------------------------------
# Fused kernel: kNN interpolation + (concat ++ MLP) as one pass
# ----------------------------------------------------------------------------
def _fp_fused_kernel(sxyz_t_ref, oxyz_ref, sfeat_ref, ofeat_ref, *refs,
                     k, n_extra_layers, compute_dtype):
    out_ref = refs[-1]
    w0o_ref, w0s_ref, b0_ref = refs[0], refs[1], refs[2]
    layer_refs = refs[3:-1]                      # (w_1, b_1, w_2, b_2, ...)

    sxyz_t = sxyz_t_ref[0]                       # (3, S)   f32
    oxyz = oxyz_ref[0]                           # (TN, 3)  f32
    sfeat = sfeat_ref[0]                         # (S, Cs)  f32
    ofeat = ofeat_ref[0]                         # (TN, Co) f32

    # --- squared pairwise distances: d = |o|^2 + |s|^2 - 2 o.s ---------------
    # Cross term on the MXU (idle during this phase).  bf16 hi/lo limb split
    # keeps near-f32 accuracy: top-k selection is precision-sensitive and raw
    # bf16 MXU inputs would reorder near-ties w.r.t. the f32 reference.
    o_hi = oxyz.astype(jnp.bfloat16)
    o_lo = (oxyz - o_hi.astype(jnp.float32)).astype(jnp.bfloat16)
    s_hi = sxyz_t.astype(jnp.bfloat16)
    s_lo = (sxyz_t - s_hi.astype(jnp.float32)).astype(jnp.bfloat16)
    cross = (jnp.dot(o_hi, s_hi, preferred_element_type=jnp.float32)
             + jnp.dot(o_lo, s_hi, preferred_element_type=jnp.float32)
             + jnp.dot(o_hi, s_lo, preferred_element_type=jnp.float32))
    o_sq = (oxyz[:, 0:1] * oxyz[:, 0:1] + oxyz[:, 1:2] * oxyz[:, 1:2]
            + oxyz[:, 2:3] * oxyz[:, 2:3])                        # (TN, 1)
    s_sq = (sxyz_t[0:1, :] * sxyz_t[0:1, :]
            + sxyz_t[1:2, :] * sxyz_t[1:2, :]
            + sxyz_t[2:3, :] * sxyz_t[2:3, :])                    # (1, S)
    # Clamp: cancellation can give tiny negatives; the sign bit would break
    # the order-preserving int32 compare below.
    d = jnp.maximum(o_sq + s_sq - 2.0 * cross, 0.0)               # (TN, S)

    # --- inverse distances once, on the EUP ----------------------------------
    inv_d = pl.reciprocal(d + 1e-8, approx=True)                  # (TN, S)

    # --- k-smallest selection: one cross-lane min-reduce per step ------------
    # Pack (distance bits | lane index) into one int32 key: d >= 0 so its bit
    # pattern is order-preserving; the low index bits break ties toward the
    # smallest index and make keys unique per row.  Only the k-th smallest key
    # is kept; the weights are built once after the loop.
    n_samples = d.shape[-1]
    idx_bits = max(1, (n_samples - 1).bit_length())
    lane_idx = jax.lax.broadcasted_iota(jnp.int32, d.shape, 1)
    d_key = ((pltpu.bitcast(d, jnp.int32) & jnp.int32(~((1 << idx_bits) - 1)))
             | lane_idx)
    big_key = jnp.int32(jnp.iinfo(jnp.int32).max)

    key_work = d_key
    kth_key = None
    for step in range(k):
        kth_key = jnp.min(key_work, axis=-1, keepdims=True)       # (TN, 1)
        if step + 1 < k:
            key_work = jnp.where(key_work == kth_key, big_key, key_work)

    # Exactly the k smallest keys per row (keys are unique per row).
    w = jnp.where(d_key <= kth_key, inv_d, 0.0)                   # (TN, S)

    # Normalize over the k selected neighbors (exact reciprocal: tiny (TN,1)
    # op, avoids stacking two approx reciprocals).
    w = w * pl.reciprocal(jnp.sum(w, axis=-1, keepdims=True), approx=False)

    # --- interpolation + fused first MLP layer (concat never materialized) ---
    cdt = compute_dtype
    interp = jnp.dot(w.astype(cdt), sfeat.astype(cdt),
                     preferred_element_type=jnp.float32)          # (TN, Cs)
    y = jnp.dot(ofeat.astype(cdt), w0o_ref[...],
                preferred_element_type=jnp.float32)
    y = y + jnp.dot(interp.astype(cdt), w0s_ref[...],
                    preferred_element_type=jnp.float32)
    y = jnp.maximum(y + b0_ref[...], 0.0)                         # (TN, C0)

    # --- remaining MLP layers, weights resident in VMEM ----------------------
    for i in range(n_extra_layers):
        w_ref = layer_refs[2 * i]
        b_ref = layer_refs[2 * i + 1]
        y = jnp.dot(y.astype(cdt), w_ref[...],
                    preferred_element_type=jnp.float32)
        y = jnp.maximum(y + b_ref[...], 0.0)

    out_ref[0] = y.astype(out_ref.dtype)


# ----------------------------------------------------------------------------
# Parameter init (deterministic, synthetic) and BN folding
# ----------------------------------------------------------------------------
def init_params(key, in_channels, mlp_out_channels):
    params = []
    c_in = in_channels
    for c_out in mlp_out_channels:
        key, k1, k2, k3, k4, k5 = jax.random.split(key, 6)
        params.append(dict(
            w=0.1 * jax.random.normal(k1, (c_out, c_in), jnp.float32),
            b=0.1 * jax.random.normal(k2, (c_out,), jnp.float32),
            gamma=1.0 + 0.1 * jax.random.normal(k3, (c_out,), jnp.float32),
            beta=0.1 * jax.random.normal(k4, (c_out,), jnp.float32),
            mean=0.1 * jax.random.normal(k5, (c_out,), jnp.float32),
            var=jnp.ones((c_out,), jnp.float32),
        ))
        c_in = c_out
    return params


def fold_bn(p, eps=1e-5):
    # BN(conv(x)) = (Wx + b - mean) * a + beta,  a = gamma / sqrt(var + eps)
    # TODO(synk): BatchNorm1d is folded with running stats (inference mode);
    # training-mode batch statistics are not computed in-kernel.
    a = p["gamma"] / jnp.sqrt(p["var"] + eps)
    wf = (p["w"] * a[:, None]).T                   # (Cin, Cout) f32
    bf = (p["b"] - p["mean"]) * a + p["beta"]      # (Cout,)     f32
    return wf, bf.reshape(1, -1)


# ----------------------------------------------------------------------------
# Generation-aware tiling: biggest N tile that fits the VMEM budget
# ----------------------------------------------------------------------------
def _cdiv(a, b):
    return (a + b - 1) // b


def _round_up(x, m):
    return ((x + m - 1) // m) * m


def _vmem_capacity_bytes():
    try:
        return int(pltpu.get_tpu_info().vmem_capacity_bytes)
    except Exception:
        return 64 * 1024 * 1024        # conservative: size for v7x's per-TC VMEM


def _choose_tiling(batch, n, s, cs, co, c_pad, max_c, weight_bytes, out_bytes):
    """Returns (TN, vmem_limit_bytes)."""
    vmem = _vmem_capacity_bytes()
    if vmem >= 100 * 1024 * 1024:       # v5e / v6e: 128 MiB VMEM, single TC
        budget = 28 * 1024 * 1024
        tn_cap = 2048
        vmem_limit = 96 * 1024 * 1024
        min_grid = 1
    else:                               # v7x: 64 MiB VMEM, 2 TCs per chip
        budget = 12 * 1024 * 1024
        tn_cap = 1024
        vmem_limit = 48 * 1024 * 1024
        min_grid = 2

    # Fixed (TN-independent) residents: double-buffered sampled xyz^T and
    # sampled features, plus the VMEM-resident MLP weights/biases.
    fixed = 2 * 4 * (3 * s) + 2 * 4 * (s * cs) + weight_bytes
    rows_budget = max(budget - fixed, 2 * 1024 * 1024)

    # Per-row working set: ~6 live f32 (TN,S) tiles during the kNN phase, a
    # bf16 copy of w for the interp matmul, double-buffered xyz/feature input
    # rows, the double-buffered output row and the widest activation.
    bytes_per_row = (24 * s + 2 * s
                     + 2 * 4 * (3 + co)
                     + 2 * out_bytes * c_pad
                     + 8 * max_c)
    max_tn = max(128, rows_budget // max(bytes_per_row, 1))

    if n <= max_tn:
        tn = n                                    # block == full dim: legal
    else:
        tn = max(128, min(tn_cap, (max_tn // 128) * 128))

    # v7x: guarantee >= 2 grid points so both TensorCores get work at B=1.
    if batch * _cdiv(n, tn) < min_grid and n >= 256:
        tn = min(tn, _round_up(_cdiv(n, 2), 128))

    return tn, vmem_limit


# ----------------------------------------------------------------------------
# Forward pass (wrapper)
# ----------------------------------------------------------------------------
def feature_propagation(params, sampled_xyz, sampled_features,
                        original_xyz, original_features, k,
                        compute_dtype=jnp.bfloat16, out_dtype=jnp.bfloat16):
    B, S, _ = sampled_xyz.shape
    _, N, Co = original_features.shape
    Cs = sampled_features.shape[-1]
    assert 0 < k <= S

    # Fold BN into the conv weights/biases (inference mode).
    folded = [fold_bn(p) for p in params]          # [(Cin,Cout) f32, (1,Cout)]
    assert folded[0][0].shape[0] == Co + Cs

    # Pad the last layer's output channels to a multiple of 128 so the only
    # HBM store is lane-dense (extra channels are relu(0 + 0) = 0).
    c_last = folded[-1][0].shape[1]
    c_pad = _round_up(c_last, 128)
    if c_pad != c_last:
        wf_l, bf_l = folded[-1]
        folded[-1] = (jnp.pad(wf_l, ((0, 0), (0, c_pad - c_last))),
                      jnp.pad(bf_l, ((0, 0), (0, c_pad - c_last))))

    # Split the first layer's weight so the concat never materializes.
    w0, b0 = folded[0]
    c0 = w0.shape[1]
    w0_o = w0[:Co].astype(compute_dtype)           # (Co, C0)
    w0_s = w0[Co:].astype(compute_dtype)           # (Cs, C0)
    extra = [(wf.astype(compute_dtype), bf) for wf, bf in folded[1:]]
    n_extra = len(extra)

    # Pre-transpose sampled xyz so no in-kernel transpose is needed.
    sxyz_t = jnp.transpose(sampled_xyz, (0, 2, 1))  # (B, 3, S)

    out_bytes = jnp.dtype(out_dtype).itemsize
    # Count weights at 2 buffers (worst case if single-buffering is rejected).
    weight_bytes = 2 * ((w0_o.size + w0_s.size) * 2 + b0.size * 4)
    for wf, bf in extra:
        weight_bytes += 2 * (wf.size * 2 + bf.size * 4)
    max_c = max([c0] + [wf.shape[1] for wf, _ in extra])

    TN, vmem_limit = _choose_tiling(B, N, S, Cs, Co, c_pad, max_c,
                                    weight_bytes, out_bytes)
    NT = _cdiv(N, TN)

    kern = functools.partial(_fp_fused_kernel, k=k, n_extra_layers=n_extra,
                             compute_dtype=compute_dtype)

    inputs = [sxyz_t, original_xyz, sampled_features, original_features,
              w0_o, w0_s, b0]
    weight_shapes = [w0_o.shape, w0_s.shape, b0.shape]
    for wf, bf in extra:
        inputs.extend([wf, bf])
        weight_shapes.extend([wf.shape, bf.shape])

    def run(single_buffer_weights):
        def const_spec(shape):
            idx_map = lambda b, n: (0,) * len(shape)
            if single_buffer_weights:
                # Constant block index -> double-buffering buys nothing; halve
                # the VMEM reserved for resident weights.
                return pl.BlockSpec(shape, idx_map,
                                    pipeline_mode=pl.Buffered(1))
            return pl.BlockSpec(shape, idx_map)

        in_specs = [
            pl.BlockSpec((1, 3, S), lambda b, n: (b, 0, 0)),      # sampled xyz^T
            pl.BlockSpec((1, TN, 3), lambda b, n: (b, n, 0)),     # original xyz
            pl.BlockSpec((1, S, Cs), lambda b, n: (b, 0, 0)),     # sampled feats
            pl.BlockSpec((1, TN, Co), lambda b, n: (b, n, 0)),    # original feats
        ] + [const_spec(ws) for ws in weight_shapes]

        return pl.pallas_call(
            kern,
            out_shape=jax.ShapeDtypeStruct((B, N, c_pad), out_dtype),
            grid_spec=pltpu.PrefetchScalarGridSpec(
                num_scalar_prefetch=0,
                grid=(B, NT),
                in_specs=in_specs,
                out_specs=pl.BlockSpec((1, TN, c_pad), lambda b, n: (b, n, 0)),
            ),
            compiler_params=pltpu.CompilerParams(
                dimension_semantics=("parallel", "parallel"),
                vmem_limit_bytes=vmem_limit,
            ),
        )(*inputs)

    try:
        out = run(True)
    except Exception:
        # pipeline_mode single-buffering unavailable on this JAX/Pallas build.
        out = run(False)

    if c_pad != c_last:
        out = out[..., :c_last]
    return out


# ----------------------------------------------------------------------------
# Pure-JAX reference (for sanity checking the kernel)
# ----------------------------------------------------------------------------
def feature_propagation_ref(params, sxyz, sfeat, oxyz, ofeat, k):
    d = jnp.sum((oxyz[:, :, None, :] - sxyz[:, None, :, :]) ** 2, -1)  # (B,N,S)
    neg_d, idx = jax.lax.top_k(-d, k)
    knn_d = -neg_d
    w = 1.0 / (knn_d + 1e-8)
    w = w / jnp.sum(w, axis=-1, keepdims=True)
    knn_feat = jnp.take_along_axis(sfeat[:, None, :, :], idx[..., None], axis=2)
    interp = jnp.sum(knn_feat * w[..., None], axis=2)
    x = jnp.concatenate([ofeat, interp], axis=-1)
    for p in params:
        wf, bf = fold_bn(p)
        x = jnp.maximum(x @ wf + bf, 0.0)
    return x


if __name__ == "__main__":
    key = jax.random.PRNGKey(0)
    B, S, N, Cs, Co = 2, 8, 16, 8, 8   # small synthetic shapes
    k = 3
    in_channels = Co + Cs              # concat(original, interpolated)
    mlp_out_channels = [32, 16]

    key, k1, k2, k3, k4, kp = jax.random.split(key, 6)
    sampled_xyz = jax.random.uniform(k1, (B, S, 3), jnp.float32)
    original_xyz = jax.random.uniform(k2, (B, N, 3), jnp.float32)
    sampled_features = jax.random.normal(k3, (B, S, Cs), jnp.float32)
    original_features = jax.random.normal(k4, (B, N, Co), jnp.float32)

    params = init_params(kp, in_channels, mlp_out_channels)

    out = feature_propagation(params, sampled_xyz, sampled_features,
                              original_xyz, original_features, k)
    out = jax.block_until_ready(out)
    assert out.shape == (B, N, mlp_out_channels[-1])

    ref = feature_propagation_ref(params, sampled_xyz, sampled_features,
                                  original_xyz, original_features, k)
    out_f32 = np.asarray(out).astype(np.float32)
    ref_f32 = np.asarray(ref).astype(np.float32)
    np.testing.assert_allclose(out_f32, ref_f32, rtol=5e-2, atol=5e-2)

    print("KERNEL_OK")
</pallas_src>

<mosaic_0001>
module attributes {stable_mosaic.version = 11 : i64} {
  func.func @_fp_fused_kernel(%arg0: i32, %arg1: i32, %arg2: memref<1x3x8xf32, #tpu.memory_space<vmem>>, %arg3: memref<1x16x3xf32, #tpu.memory_space<vmem>>, %arg4: memref<1x8x8xf32, #tpu.memory_space<vmem>>, %arg5: memref<1x16x8xf32, #tpu.memory_space<vmem>>, %arg6: memref<8x32xbf16, #tpu.memory_space<vmem>>, %arg7: memref<8x32xbf16, #tpu.memory_space<vmem>>, %arg8: memref<1x32xf32, #tpu.memory_space<vmem>>, %arg9: memref<32x128xbf16, #tpu.memory_space<vmem>>, %arg10: memref<1x128xf32, #tpu.memory_space<vmem>>, %arg11: memref<1x16x128xbf16, #tpu.memory_space<vmem>>) attributes {dimension_semantics = [#tpu.dimension_semantics<parallel>, #tpu.dimension_semantics<parallel>], iteration_bounds = array<i64: 2, 1>, scalar_prefetch = 0 : i64, scratch_operands = 0 : i64, tpu.core_type = #tpu.core_type<tc>, window_params = [{transform_indices = @transform_0, window_bounds = array<i64: 1, 3, 8>}, {transform_indices = @transform_1, window_bounds = array<i64: 1, 16, 3>}, {transform_indices = @transform_2, window_bounds = array<i64: 1, 8, 8>}, {transform_indices = @transform_3, window_bounds = array<i64: 1, 16, 8>}, {pipeline_mode = #tpu.pipeline_mode<synchronous>, transform_indices = @transform_4, window_bounds = array<i64: 8, 32>}, {pipeline_mode = #tpu.pipeline_mode<synchronous>, transform_indices = @transform_5, window_bounds = array<i64: 8, 32>}, {pipeline_mode = #tpu.pipeline_mode<synchronous>, transform_indices = @transform_6, window_bounds = array<i64: 1, 32>}, {pipeline_mode = #tpu.pipeline_mode<synchronous>, transform_indices = @transform_7, window_bounds = array<i64: 32, 128>}, {pipeline_mode = #tpu.pipeline_mode<synchronous>, transform_indices = @transform_8, window_bounds = array<i64: 1, 128>}, {transform_indices = @transform_9, window_bounds = array<i64: 1, 16, 128>}]} {
    %c0 = arith.constant 0 : index
    %c0_0 = arith.constant 0 : index
    %c0_1 = arith.constant 0 : index
    %0 = vector.load %arg2[%c0, %c0_0, %c0_1] : memref<1x3x8xf32, #tpu.memory_space<vmem>>, vector<1x3x8xf32>
    %1 = vector.shape_cast %0 : vector<1x3x8xf32> to vector<3x8xf32>
    %c0_2 = arith.constant 0 : index
    %c0_3 = arith.constant 0 : index
    %c0_4 = arith.constant 0 : index
    %2 = vector.load %arg3[%c0_2, %c0_3, %c0_4] : memref<1x16x3xf32, #tpu.memory_space<vmem>>, vector<1x16x3xf32>
    %3 = vector.shape_cast %2 : vector<1x16x3xf32> to vector<16x3xf32>
    %c0_5 = arith.constant 0 : index
    %c0_6 = arith.constant 0 : index
    %c0_7 = arith.constant 0 : index
    %4 = vector.load %arg4[%c0_5, %c0_6, %c0_7] : memref<1x8x8xf32, #tpu.memory_space<vmem>>, vector<1x8x8xf32>
    %5 = vector.shape_cast %4 : vector<1x8x8xf32> to vector<8x8xf32>
    %c0_8 = arith.constant 0 : index
    %c0_9 = arith.constant 0 : index
    %c0_10 = arith.constant 0 : index
    %6 = vector.load %arg5[%c0_8, %c0_9, %c0_10] : memref<1x16x8xf32, #tpu.memory_space<vmem>>, vector<1x16x8xf32>
    %7 = vector.shape_cast %6 : vector<1x16x8xf32> to vector<16x8xf32>
    %8 = arith.truncf %3 : vector<16x3xf32> to vector<16x3xbf16>
    %9 = arith.extf %8 : vector<16x3xbf16> to vector<16x3xf32>
    %10 = arith.subf %3, %9 : vector<16x3xf32>
    %11 = arith.truncf %10 : vector<16x3xf32> to vector<16x3xbf16>
    %12 = arith.truncf %1 : vector<3x8xf32> to vector<3x8xbf16>
    %13 = arith.extf %12 : vector<3x8xbf16> to vector<3x8xf32>
    %14 = arith.subf %1, %13 : vector<3x8xf32>
    %15 = arith.truncf %14 : vector<3x8xf32> to vector<3x8xbf16>
    %cst = arith.constant dense<0.000000e+00> : vector<16x8xf32>
    %16 = tpu.matmul %8, %12, %cst {dimension_numbers = #tpu.dot_dimension_numbers<[1], [0], [0], [1], [0, 0, 1, 1], [], []>} : vector<16x3xbf16>, vector<3x8xbf16>, vector<16x8xf32> -> vector<16x8xf32>
    %cst_11 = arith.constant dense<0.000000e+00> : vector<16x8xf32>
    %17 = tpu.matmul %11, %12, %cst_11 {dimension_numbers = #tpu.dot_dimension_numbers<[1], [0], [0], [1], [0, 0, 1, 1], [], []>} : vector<16x3xbf16>, vector<3x8xbf16>, vector<16x8xf32> -> vector<16x8xf32>
    %18 = arith.addf %16, %17 : vector<16x8xf32>
    %cst_12 = arith.constant dense<0.000000e+00> : vector<16x8xf32>
    %19 = tpu.matmul %8, %15, %cst_12 {dimension_numbers = #tpu.dot_dimension_numbers<[1], [0], [0], [1], [0, 0, 1, 1], [], []>} : vector<16x3xbf16>, vector<3x8xbf16>, vector<16x8xf32> -> vector<16x8xf32>
    %20 = arith.addf %18, %19 : vector<16x8xf32>
    %21 = vector.extract_strided_slice %3 {offsets = [0, 0], sizes = [16, 1], strides = [1, 1]} : vector<16x3xf32> to vector<16x1xf32>
    %22 = vector.extract_strided_slice %3 {offsets = [0, 0], sizes = [16, 1], strides = [1, 1]} : vector<16x3xf32> to vector<16x1xf32>
    %23 = arith.mulf %21, %22 : vector<16x1xf32>
    %24 = vector.extract_strided_slice %3 {offsets = [0, 1], sizes = [16, 1], strides = [1, 1]} : vector<16x3xf32> to vector<16x1xf32>
    %25 = vector.extract_strided_slice %3 {offsets = [0, 1], sizes = [16, 1], strides = [1, 1]} : vector<16x3xf32> to vector<16x1xf32>
    %26 = arith.mulf %24, %25 : vector<16x1xf32>
    %27 = arith.addf %23, %26 : vector<16x1xf32>
    %28 = vector.extract_strided_slice %3 {offsets = [0, 2], sizes = [16, 1], strides = [1, 1]} : vector<16x3xf32> to vector<16x1xf32>
    %29 = vector.extract_strided_slice %3 {offsets = [0, 2], sizes = [16, 1], strides = [1, 1]} : vector<16x3xf32> to vector<16x1xf32>
    %30 = arith.mulf %28, %29 : vector<16x1xf32>
    %31 = arith.addf %27, %30 : vector<16x1xf32>
    %32 = vector.extract_strided_slice %1 {offsets = [0, 0], sizes = [1, 8], strides = [1, 1]} : vector<3x8xf32> to vector<1x8xf32>
    %33 = vector.extract_strided_slice %1 {offsets = [0, 0], sizes = [1, 8], strides = [1, 1]} : vector<3x8xf32> to vector<1x8xf32>
    %34 = arith.mulf %32, %33 : vector<1x8xf32>
    %35 = vector.extract_strided_slice %1 {offsets = [1, 0], sizes = [1, 8], strides = [1, 1]} : vector<3x8xf32> to vector<1x8xf32>
    %36 = vector.extract_strided_slice %1 {offsets = [1, 0], sizes = [1, 8], strides = [1, 1]} : vector<3x8xf32> to vector<1x8xf32>
    %37 = arith.mulf %35, %36 : vector<1x8xf32>
    %38 = arith.addf %34, %37 : vector<1x8xf32>
    %39 = vector.extract_strided_slice %1 {offsets = [2, 0], sizes = [1, 8], strides = [1, 1]} : vector<3x8xf32> to vector<1x8xf32>
    %40 = vector.extract_strided_slice %1 {offsets = [2, 0], sizes = [1, 8], strides = [1, 1]} : vector<3x8xf32> to vector<1x8xf32>
    %41 = arith.mulf %39, %40 : vector<1x8xf32>
    %42 = arith.addf %38, %41 : vector<1x8xf32>
    %43 = vector.broadcast %31 : vector<16x1xf32> to vector<16x8xf32>
    %44 = vector.broadcast %42 : vector<1x8xf32> to vector<16x8xf32>
    %45 = arith.addf %43, %44 : vector<16x8xf32>
    %cst_13 = arith.constant 2.000000e+00 : f32
    %46 = vector.broadcast %cst_13 : f32 to vector<16x8xf32>
    %47 = arith.mulf %46, %20 : vector<16x8xf32>
    %48 = arith.subf %45, %47 : vector<16x8xf32>
    %cst_14 = arith.constant 0.000000e+00 : f32
    %49 = vector.broadcast %cst_14 : f32 to vector<16x8xf32>
    %50 = arith.maximumf %48, %49 : vector<16x8xf32>
    %cst_15 = arith.constant 9.99999993E-9 : f32
    %51 = vector.broadcast %cst_15 : f32 to vector<16x8xf32>
    %52 = arith.addf %50, %51 : vector<16x8xf32>
    %53 = tpu.reciprocal %52 {approx = true} : vector<16x8xf32> -> vector<16x8xf32>
    %54 = tpu.iota {dimensions = array<i32: 1>} : vector<16x8xi32>
    %55 = tpu.bitcast %50 : vector<16x8xf32> -> vector<16x8xi32>
    %c-8_i32 = arith.constant -8 : i32
    %56 = vector.broadcast %c-8_i32 : i32 to vector<16x8xi32>
    %57 = arith.andi %55, %56 : vector<16x8xi32>
    %58 = arith.ori %57, %54 : vector<16x8xi32>
    %cst_16 = arith.constant dense<2147483647> : vector<16xi32>
    %59 = vector.multi_reduction <minsi>, %58, %cst_16 [1] : vector<16x8xi32> to vector<16xi32>
    %60 = vector.shape_cast %59 : vector<16xi32> to vector<16x1xi32>
    %61 = vector.broadcast %60 : vector<16x1xi32> to vector<16x8xi32>
    %62 = arith.cmpi eq, %58, %61 : vector<16x8xi32>
    %c2147483647_i32 = arith.constant 2147483647 : i32
    %63 = vector.broadcast %c2147483647_i32 : i32 to vector<16x8xi32>
    %64 = arith.select %62, %63, %58 : vector<16x8xi1>, vector<16x8xi32>
    %cst_17 = arith.constant dense<2147483647> : vector<16xi32>
    %65 = vector.multi_reduction <minsi>, %64, %cst_17 [1] : vector<16x8xi32> to vector<16xi32>
    %66 = vector.shape_cast %65 : vector<16xi32> to vector<16x1xi32>
    %67 = vector.broadcast %66 : vector<16x1xi32> to vector<16x8xi32>
    %68 = arith.cmpi eq, %64, %67 : vector<16x8xi32>
    %c2147483647_i32_18 = arith.constant 2147483647 : i32
    %69 = vector.broadcast %c2147483647_i32_18 : i32 to vector<16x8xi32>
    %70 = arith.select %68, %69, %64 : vector<16x8xi1>, vector<16x8xi32>
    %cst_19 = arith.constant dense<2147483647> : vector<16xi32>
    %71 = vector.multi_reduction <minsi>, %70, %cst_19 [1] : vector<16x8xi32> to vector<16xi32>
    %72 = vector.shape_cast %71 : vector<16xi32> to vector<16x1xi32>
    %73 = vector.broadcast %72 : vector<16x1xi32> to vector<16x8xi32>
    %74 = arith.cmpi sle, %58, %73 : vector<16x8xi32>
    %cst_20 = arith.constant 0.000000e+00 : f32
    %75 = vector.broadcast %cst_20 : f32 to vector<16x8xf32>
    %76 = arith.select %74, %53, %75 : vector<16x8xi1>, vector<16x8xf32>
    %cst_21 = arith.constant dense<0.000000e+00> : vector<16xf32>
    %77 = vector.multi_reduction <add>, %76, %cst_21 [1] : vector<16x8xf32> to vector<16xf32>
    %78 = vector.shape_cast %77 : vector<16xf32> to vector<16x1xf32>
    %79 = tpu.reciprocal %78 : vector<16x1xf32> -> vector<16x1xf32>
    %80 = vector.broadcast %79 : vector<16x1xf32> to vector<16x8xf32>
    %81 = arith.mulf %76, %80 : vector<16x8xf32>
    %82 = arith.truncf %81 : vector<16x8xf32> to vector<16x8xbf16>
    %83 = arith.truncf %5 : vector<8x8xf32> to vector<8x8xbf16>
    %cst_22 = arith.constant dense<0.000000e+00> : vector<16x8xf32>
    %84 = tpu.matmul %82, %83, %cst_22 {dimension_numbers = #tpu.dot_dimension_numbers<[1], [0], [0], [1], [0, 0, 1, 1], [], []>} : vector<16x8xbf16>, vector<8x8xbf16>, vector<16x8xf32> -> vector<16x8xf32>
    %85 = arith.truncf %7 : vector<16x8xf32> to vector<16x8xbf16>
    %c0_23 = arith.constant 0 : index
    %c0_24 = arith.constant 0 : index
    %86 = vector.load %arg6[%c0_23, %c0_24] : memref<8x32xbf16, #tpu.memory_space<vmem>>, vector<8x32xbf16>
    %cst_25 = arith.constant dense<0.000000e+00> : vector<16x32xf32>
    %87 = tpu.matmul %85, %86, %cst_25 {dimension_numbers = #tpu.dot_dimension_numbers<[1], [0], [0], [1], [0, 0, 1, 1], [], []>} : vector<16x8xbf16>, vector<8x32xbf16>, vector<16x32xf32> -> vector<16x32xf32>
    %88 = arith.truncf %84 : vector<16x8xf32> to vector<16x8xbf16>
    %c0_26 = arith.constant 0 : index
    %c0_27 = arith.constant 0 : index
    %89 = vector.load %arg7[%c0_26, %c0_27] : memref<8x32xbf16, #tpu.memory_space<vmem>>, vector<8x32xbf16>
    %cst_28 = arith.constant dense<0.000000e+00> : vector<16x32xf32>
    %90 = tpu.matmul %88, %89, %cst_28 {dimension_numbers = #tpu.dot_dimension_numbers<[1], [0], [0], [1], [0, 0, 1, 1], [], []>} : vector<16x8xbf16>, vector<8x32xbf16>, vector<16x32xf32> -> vector<16x32xf32>
    %91 = arith.addf %87, %90 : vector<16x32xf32>
    %c0_29 = arith.constant 0 : index
    %c0_30 = arith.constant 0 : index
    %92 = vector.load %arg8[%c0_29, %c0_30] : memref<1x32xf32, #tpu.memory_space<vmem>>, vector<1x32xf32>
    %93 = vector.broadcast %92 : vector<1x32xf32> to vector<16x32xf32>
    %94 = arith.addf %91, %93 : vector<16x32xf32>
    %cst_31 = arith.constant 0.000000e+00 : f32
    %95 = vector.broadcast %cst_31 : f32 to vector<16x32xf32>
    %96 = arith.maximumf %94, %95 : vector<16x32xf32>
    %97 = arith.truncf %96 : vector<16x32xf32> to vector<16x32xbf16>
    %c0_32 = arith.constant 0 : index
    %c0_33 = arith.constant 0 : index
    %98 = vector.load %arg9[%c0_32, %c0_33] : memref<32x128xbf16, #tpu.memory_space<vmem>>, vector<32x128xbf16>
    %cst_34 = arith.constant dense<0.000000e+00> : vector<16x128xf32>
    %99 = tpu.matmul %97, %98, %cst_34 {dimension_numbers = #tpu.dot_dimension_numbers<[1], [0], [0], [1], [0, 0, 1, 1], [], []>} : vector<16x32xbf16>, vector<32x128xbf16>, vector<16x128xf32> -> vector<16x128xf32>
    %c0_35 = arith.constant 0 : index
    %c0_36 = arith.constant 0 : index
    %100 = vector.load %arg10[%c0_35, %c0_36] : memref<1x128xf32, #tpu.memory_space<vmem>>, vector<1x128xf32>
    %101 = vector.broadcast %100 : vector<1x128xf32> to vector<16x128xf32>
    %102 = arith.addf %99, %101 : vector<16x128xf32>
    %cst_37 = arith.constant 0.000000e+00 : f32
    %103 = vector.broadcast %cst_37 : f32 to vector<16x128xf32>
    %104 = arith.maximumf %102, %103 : vector<16x128xf32>
    %105 = arith.truncf %104 : vector<16x128xf32> to vector<16x128xbf16>
    %c0_38 = arith.constant 0 : index
    %c0_39 = arith.constant 0 : index
    %c0_40 = arith.constant 0 : index
    %106 = vector.load %arg11[%c0_38, %c0_39, %c0_40] : memref<1x16x128xbf16, #tpu.memory_space<vmem>>, vector<1x16x128xbf16>
    %107 = vector.shape_cast %106 : vector<1x16x128xbf16> to vector<16x128xbf16>
    %108 = vector.shape_cast %105 : vector<16x128xbf16> to vector<1x16x128xbf16>
    tpu.vector_store %arg11[%c0_38, %c0_39, %c0_40], %108 {strides = array<i32>} : memref<1x16x128xbf16, #tpu.memory_space<vmem>>, vector<1x16x128xbf16>,
    return
  }
  func.func @transform_0(%arg0: i32, %arg1: i32) -> (i32, i32, i32) {
    %c0_i32 = arith.constant 0 : i32
    %c0_i32_0 = arith.constant 0 : i32
    %c0_i32_1 = arith.constant 0 : i32
    return %arg0, %c0_i32, %c0_i32_0 : i32, i32, i32
  }
  func.func @transform_1(%arg0: i32, %arg1: i32) -> (i32, i32, i32) {
    %c0_i32 = arith.constant 0 : i32
    %c0_i32_0 = arith.constant 0 : i32
    return %arg0, %arg1, %c0_i32 : i32, i32, i32
  }
  func.func @transform_2(%arg0: i32, %arg1: i32) -> (i32, i32, i32) {
    %c0_i32 = arith.constant 0 : i32
    %c0_i32_0 = arith.constant 0 : i32
    %c0_i32_1 = arith.constant 0 : i32
    return %arg0, %c0_i32, %c0_i32_0 : i32, i32, i32
  }
  func.func @transform_3(%arg0: i32, %arg1: i32) -> (i32, i32, i32) {
    %c0_i32 = arith.constant 0 : i32
    %c0_i32_0 = arith.constant 0 : i32
    return %arg0, %arg1, %c0_i32 : i32, i32, i32
  }
  func.func @transform_4(%arg0: i32, %arg1: i32) -> (i32, i32) {
    %c0_i32 = arith.constant 0 : i32
    %c0_i32_0 = arith.constant 0 : i32
    %c0_i32_1 = arith.constant 0 : i32
    return %c0_i32, %c0_i32_0 : i32, i32
  }
  func.func @transform_5(%arg0: i32, %arg1: i32) -> (i32, i32) {
    %c0_i32 = arith.constant 0 : i32
    %c0_i32_0 = arith.constant 0 : i32
    %c0_i32_1 = arith.constant 0 : i32
    return %c0_i32, %c0_i32_0 : i32, i32
  }
  func.func @transform_6(%arg0: i32, %arg1: i32) -> (i32, i32) {
    %c0_i32 = arith.constant 0 : i32
    %c0_i32_0 = arith.constant 0 : i32
    %c0_i32_1 = arith.constant 0 : i32
    return %c0_i32, %c0_i32_0 : i32, i32
  }
  func.func @transform_7(%arg0: i32, %arg1: i32) -> (i32, i32) {
    %c0_i32 = arith.constant 0 : i32
    %c0_i32_0 = arith.constant 0 : i32
    %c0_i32_1 = arith.constant 0 : i32
    return %c0_i32, %c0_i32_0 : i32, i32
  }
  func.func @transform_8(%arg0: i32, %arg1: i32) -> (i32, i32) {
    %c0_i32 = arith.constant 0 : i32
    %c0_i32_0 = arith.constant 0 : i32
    %c0_i32_1 = arith.constant 0 : i32
    return %c0_i32, %c0_i32_0 : i32, i32
  }
  func.func @transform_9(%arg0: i32, %arg1: i32) -> (i32, i32, i32) {
    %c0_i32 = arith.constant 0 : i32
    %c0_i32_0 = arith.constant 0 : i32
    return %arg0, %arg1, %c0_i32 : i32, i32, i32
  }
}

module attributes {stable_mosaic.version = 11 : i64} {
  func.func @_fp_fused_kernel(%arg0: i32, %arg1: i32, %arg2: memref<1x3x8xf32, #tpu.memory_space<vmem>>, %arg3: memref<1x16x3xf32, #tpu.memory_space<vmem>>, %arg4: memref<1x8x8xf32, #tpu.memory_space<vmem>>, %arg5: memref<1x16x8xf32, #tpu.memory_space<vmem>>, %arg6: memref<8x32xbf16, #tpu.memory_space<vmem>>, %arg7: memref<8x32xbf16, #tpu.memory_space<vmem>>, %arg8: memref<1x32xf32, #tpu.memory_space<vmem>>, %arg9: memref<32x128xbf16, #tpu.memory_space<vmem>>, %arg10: memref<1x128xf32, #tpu.memory_space<vmem>>, %arg11: memref<1x16x128xbf16, #tpu.memory_space<vmem>>) attributes {dimension_semantics = [#tpu.dimension_semantics<parallel>, #tpu.dimension_semantics<parallel>], iteration_bounds = array<i64: 2, 1>, scalar_prefetch = 0 : i64, scratch_operands = 0 : i64, tpu.core_type = #tpu.core_type<tc>, window_params = [{transform_indices = @transform_0, window_bounds = array<i64: 1, 3, 8>}, {transform_indices = @transform_1, window_bounds = array<i64: 1, 16, 3>}, {transform_indices = @transform_2, window_bounds = array<i64: 1, 8, 8>}, {transform_indices = @transform_3, window_bounds = array<i64: 1, 16, 8>}, {pipeline_mode = #tpu.pipeline_mode<synchronous>, transform_indices = @transform_4, window_bounds = array<i64: 8, 32>}, {pipeline_mode = #tpu.pipeline_mode<synchronous>, transform_indices = @transform_5, window_bounds = array<i64: 8, 32>}, {pipeline_mode = #tpu.pipeline_mode<synchronous>, transform_indices = @transform_6, window_bounds = array<i64: 1, 32>}, {pipeline_mode = #tpu.pipeline_mode<synchronous>, transform_indices = @transform_7, window_bounds = array<i64: 32, 128>}, {pipeline_mode = #tpu.pipeline_mode<synchronous>, transform_indices = @transform_8, window_bounds = array<i64: 1, 128>}, {transform_indices = @transform_9, window_bounds = array<i64: 1, 16, 128>}]} {
    %c0 = arith.constant 0 : index
    %c0_0 = arith.constant 0 : index
    %c0_1 = arith.constant 0 : index
    %0 = vector.load %arg2[%c0, %c0_0, %c0_1] : memref<1x3x8xf32, #tpu.memory_space<vmem>>, vector<1x3x8xf32>
    %1 = vector.shape_cast %0 : vector<1x3x8xf32> to vector<3x8xf32>
    %c0_2 = arith.constant 0 : index
    %c0_3 = arith.constant 0 : index
    %c0_4 = arith.constant 0 : index
    %2 = vector.load %arg3[%c0_2, %c0_3, %c0_4] : memref<1x16x3xf32, #tpu.memory_space<vmem>>, vector<1x16x3xf32>
    %3 = vector.shape_cast %2 : vector<1x16x3xf32> to vector<16x3xf32>
    %c0_5 = arith.constant 0 : index
    %c0_6 = arith.constant 0 : index
    %c0_7 = arith.constant 0 : index
    %4 = vector.load %arg4[%c0_5, %c0_6, %c0_7] : memref<1x8x8xf32, #tpu.memory_space<vmem>>, vector<1x8x8xf32>
    %5 = vector.shape_cast %4 : vector<1x8x8xf32> to vector<8x8xf32>
    %c0_8 = arith.constant 0 : index
    %c0_9 = arith.constant 0 : index
    %c0_10 = arith.constant 0 : index
    %6 = vector.load %arg5[%c0_8, %c0_9, %c0_10] : memref<1x16x8xf32, #tpu.memory_space<vmem>>, vector<1x16x8xf32>
    %7 = vector.shape_cast %6 : vector<1x16x8xf32> to vector<16x8xf32>
    %8 = arith.truncf %3 : vector<16x3xf32> to vector<16x3xbf16>
    %9 = arith.extf %8 : vector<16x3xbf16> to vector<16x3xf32>
    %10 = arith.subf %3, %9 : vector<16x3xf32>
    %11 = arith.truncf %10 : vector<16x3xf32> to vector<16x3xbf16>
    %12 = arith.truncf %1 : vector<3x8xf32> to vector<3x8xbf16>
    %13 = arith.extf %12 : vector<3x8xbf16> to vector<3x8xf32>
    %14 = arith.subf %1, %13 : vector<3x8xf32>
    %15 = arith.truncf %14 : vector<3x8xf32> to vector<3x8xbf16>
    %cst = arith.constant dense<0.000000e+00> : vector<16x8xf32>
    %16 = tpu.matmul %8, %12, %cst {dimension_numbers = #tpu.dot_dimension_numbers<[1], [0], [0], [1], [0, 0, 1, 1], [], []>} : vector<16x3xbf16>, vector<3x8xbf16>, vector<16x8xf32> -> vector<16x8xf32>
    %cst_11 = arith.constant dense<0.000000e+00> : vector<16x8xf32>
    %17 = tpu.matmul %11, %12, %cst_11 {dimension_numbers = #tpu.dot_dimension_numbers<[1], [0], [0], [1], [0, 0, 1, 1], [], []>} : vector<16x3xbf16>, vector<3x8xbf16>, vector<16x8xf32> -> vector<16x8xf32>
    %18 = arith.addf %16, %17 : vector<16x8xf32>
    %cst_12 = arith.constant dense<0.000000e+00> : vector<16x8xf32>
    %19 = tpu.matmul %8, %15, %cst_12 {dimension_numbers = #tpu.dot_dimension_numbers<[1], [0], [0], [1], [0, 0, 1, 1], [], []>} : vector<16x3xbf16>, vector<3x8xbf16>, vector<16x8xf32> -> vector<16x8xf32>
    %20 = arith.addf %18, %19 : vector<16x8xf32>
    %21 = vector.extract_strided_slice %3 {offsets = [0, 0], sizes = [16, 1], strides = [1, 1]} : vector<16x3xf32> to vector<16x1xf32>
    %22 = vector.extract_strided_slice %3 {offsets = [0, 0], sizes = [16, 1], strides = [1, 1]} : vector<16x3xf32> to vector<16x1xf32>
    %23 = arith.mulf %21, %22 : vector<16x1xf32>
    %24 = vector.extract_strided_slice %3 {offsets = [0, 1], sizes = [16, 1], strides = [1, 1]} : vector<16x3xf32> to vector<16x1xf32>
    %25 = vector.extract_strided_slice %3 {offsets = [0, 1], sizes = [16, 1], strides = [1, 1]} : vector<16x3xf32> to vector<16x1xf32>
    %26 = arith.mulf %24, %25 : vector<16x1xf32>
    %27 = arith.addf %23, %26 : vector<16x1xf32>
    %28 = vector.extract_strided_slice %3 {offsets = [0, 2], sizes = [16, 1], strides = [1, 1]} : vector<16x3xf32> to vector<16x1xf32>
    %29 = vector.extract_strided_slice %3 {offsets = [0, 2], sizes = [16, 1], strides = [1, 1]} : vector<16x3xf32> to vector<16x1xf32>
    %30 = arith.mulf %28, %29 : vector<16x1xf32>
    %31 = arith.addf %27, %30 : vector<16x1xf32>
    %32 = vector.extract_strided_slice %1 {offsets = [0, 0], sizes = [1, 8], strides = [1, 1]} : vector<3x8xf32> to vector<1x8xf32>
    %33 = vector.extract_strided_slice %1 {offsets = [0, 0], sizes = [1, 8], strides = [1, 1]} : vector<3x8xf32> to vector<1x8xf32>
    %34 = arith.mulf %32, %33 : vector<1x8xf32>
    %35 = vector.extract_strided_slice %1 {offsets = [1, 0], sizes = [1, 8], strides = [1, 1]} : vector<3x8xf32> to vector<1x8xf32>
    %36 = vector.extract_strided_slice %1 {offsets = [1, 0], sizes = [1, 8], strides = [1, 1]} : vector<3x8xf32> to vector<1x8xf32>
    %37 = arith.mulf %35, %36 : vector<1x8xf32>
    %38 = arith.addf %34, %37 : vector<1x8xf32>
    %39 = vector.extract_strided_slice %1 {offsets = [2, 0], sizes = [1, 8], strides = [1, 1]} : vector<3x8xf32> to vector<1x8xf32>
    %40 = vector.extract_strided_slice %1 {offsets = [2, 0], sizes = [1, 8], strides = [1, 1]} : vector<3x8xf32> to vector<1x8xf32>
    %41 = arith.mulf %39, %40 : vector<1x8xf32>
    %42 = arith.addf %38, %41 : vector<1x8xf32>
    %43 = vector.broadcast %31 : vector<16x1xf32> to vector<16x8xf32>
    %44 = vector.broadcast %42 : vector<1x8xf32> to vector<16x8xf32>
    %45 = arith.addf %43, %44 : vector<16x8xf32>
    %cst_13 = arith.constant 2.000000e+00 : f32
    %46 = vector.broadcast %cst_13 : f32 to vector<16x8xf32>
    %47 = arith.mulf %46, %20 : vector<16x8xf32>
    %48 = arith.subf %45, %47 : vector<16x8xf32>
    %cst_14 = arith.constant 0.000000e+00 : f32
    %49 = vector.broadcast %cst_14 : f32 to vector<16x8xf32>
    %50 = arith.maximumf %48, %49 : vector<16x8xf32>
    %cst_15 = arith.constant 9.99999993E-9 : f32
    %51 = vector.broadcast %cst_15 : f32 to vector<16x8xf32>
    %52 = arith.addf %50, %51 : vector<16x8xf32>
    %53 = tpu.reciprocal %52 {approx = true} : vector<16x8xf32> -> vector<16x8xf32>
    %54 = tpu.iota {dimensions = array<i32: 1>} : vector<16x8xi32>
    %55 = tpu.bitcast %50 : vector<16x8xf32> -> vector<16x8xi32>
    %c-8_i32 = arith.constant -8 : i32
    %56 = vector.broadcast %c-8_i32 : i32 to vector<16x8xi32>
    %57 = arith.andi %55, %56 : vector<16x8xi32>
    %58 = arith.ori %57, %54 : vector<16x8xi32>
    %cst_16 = arith.constant dense<2147483647> : vector<16xi32>
    %59 = vector.multi_reduction <minsi>, %58, %cst_16 [1] : vector<16x8xi32> to vector<16xi32>
    %60 = vector.shape_cast %59 : vector<16xi32> to vector<16x1xi32>
    %61 = vector.broadcast %60 : vector<16x1xi32> to vector<16x8xi32>
    %62 = arith.cmpi eq, %58, %61 : vector<16x8xi32>
    %c2147483647_i32 = arith.constant 2147483647 : i32
    %63 = vector.broadcast %c2147483647_i32 : i32 to vector<16x8xi32>
    %64 = arith.select %62, %63, %58 : vector<16x8xi1>, vector<16x8xi32>
    %cst_17 = arith.constant dense<2147483647> : vector<16xi32>
    %65 = vector.multi_reduction <minsi>, %64, %cst_17 [1] : vector<16x8xi32> to vector<16xi32>
    %66 = vector.shape_cast %65 : vector<16xi32> to vector<16x1xi32>
    %67 = vector.broadcast %66 : vector<16x1xi32> to vector<16x8xi32>
    %68 = arith.cmpi eq, %64, %67 : vector<16x8xi32>
    %c2147483647_i32_18 = arith.constant 2147483647 : i32
    %69 = vector.broadcast %c2147483647_i32_18 : i32 to vector<16x8xi32>
    %70 = arith.select %68, %69, %64 : vector<16x8xi1>, vector<16x8xi32>
    %cst_19 = arith.constant dense<2147483647> : vector<16xi32>
    %71 = vector.multi_reduction <minsi>, %70, %cst_19 [1] : vector<16x8xi32> to vector<16xi32>
    %72 = vector.shape_cast %71 : vector<16xi32> to vector<16x1xi32>
    %73 = vector.broadcast %72 : vector<16x1xi32> to vector<16x8xi32>
    %74 = arith.cmpi sle, %58, %73 : vector<16x8xi32>
    %cst_20 = arith.constant 0.000000e+00 : f32
    %75 = vector.broadcast %cst_20 : f32 to vector<16x8xf32>
    %76 = arith.select %74, %53, %75 : vector<16x8xi1>, vector<16x8xf32>
    %cst_21 = arith.constant dense<0.000000e+00> : vector<16xf32>
    %77 = vector.multi_reduction <add>, %76, %cst_21 [1] : vector<16x8xf32> to vector<16xf32>
    %78 = vector.shape_cast %77 : vector<16xf32> to vector<16x1xf32>
    %79 = tpu.reciprocal %78 : vector<16x1xf32> -> vector<16x1xf32>
    %80 = vector.broadcast %79 : vector<16x1xf32> to vector<16x8xf32>
    %81 = arith.mulf %76, %80 : vector<16x8xf32>
    %82 = arith.truncf %81 : vector<16x8xf32> to vector<16x8xbf16>
    %83 = arith.truncf %5 : vector<8x8xf32> to vector<8x8xbf16>
    %cst_22 = arith.constant dense<0.000000e+00> : vector<16x8xf32>
    %84 = tpu.matmul %82, %83, %cst_22 {dimension_numbers = #tpu.dot_dimension_numbers<[1], [0], [0], [1], [0, 0, 1, 1], [], []>} : vector<16x8xbf16>, vector<8x8xbf16>, vector<16x8xf32> -> vector<16x8xf32>
    %85 = arith.truncf %7 : vector<16x8xf32> to vector<16x8xbf16>
    %c0_23 = arith.constant 0 : index
    %c0_24 = arith.constant 0 : index
    %86 = vector.load %arg6[%c0_23, %c0_24] : memref<8x32xbf16, #tpu.memory_space<vmem>>, vector<8x32xbf16>
    %cst_25 = arith.constant dense<0.000000e+00> : vector<16x32xf32>
    %87 = tpu.matmul %85, %86, %cst_25 {dimension_numbers = #tpu.dot_dimension_numbers<[1], [0], [0], [1], [0, 0, 1, 1], [], []>} : vector<16x8xbf16>, vector<8x32xbf16>, vector<16x32xf32> -> vector<16x32xf32>
    %88 = arith.truncf %84 : vector<16x8xf32> to vector<16x8xbf16>
    %c0_26 = arith.constant 0 : index
    %c0_27 = arith.constant 0 : index
    %89 = vector.load %arg7[%c0_26, %c0_27] : memref<8x32xbf16, #tpu.memory_space<vmem>>, vector<8x32xbf16>
    %cst_28 = arith.constant dense<0.000000e+00> : vector<16x32xf32>
    %90 = tpu.matmul %88, %89, %cst_28 {dimension_numbers = #tpu.dot_dimension_numbers<[1], [0], [0], [1], [0, 0, 1, 1], [], []>} : vector<16x8xbf16>, vector<8x32xbf16>, vector<16x32xf32> -> vector<16x32xf32>
    %91 = arith.addf %87, %90 : vector<16x32xf32>
    %c0_29 = arith.constant 0 : index
    %c0_30 = arith.constant 0 : index
    %92 = vector.load %arg8[%c0_29, %c0_30] : memref<1x32xf32, #tpu.memory_space<vmem>>, vector<1x32xf32>
    %93 = vector.broadcast %92 : vector<1x32xf32> to vector<16x32xf32>
    %94 = arith.addf %91, %93 : vector<16x32xf32>
    %cst_31 = arith.constant 0.000000e+00 : f32
    %95 = vector.broadcast %cst_31 : f32 to vector<16x32xf32>
    %96 = arith.maximumf %94, %95 : vector<16x32xf32>
    %97 = arith.truncf %96 : vector<16x32xf32> to vector<16x32xbf16>
    %c0_32 = arith.constant 0 : index
    %c0_33 = arith.constant 0 : index
    %98 = vector.load %arg9[%c0_32, %c0_33] : memref<32x128xbf16, #tpu.memory_space<vmem>>, vector<32x128xbf16>
    %cst_34 = arith.constant dense<0.000000e+00> : vector<16x128xf32>
    %99 = tpu.matmul %97, %98, %cst_34 {dimension_numbers = #tpu.dot_dimension_numbers<[1], [0], [0], [1], [0, 0, 1, 1], [], []>} : vector<16x32xbf16>, vector<32x128xbf16>, vector<16x128xf32> -> vector<16x128xf32>
    %c0_35 = arith.constant 0 : index
    %c0_36 = arith.constant 0 : index
    %100 = vector.load %arg10[%c0_35, %c0_36] : memref<1x128xf32, #tpu.memory_space<vmem>>, vector<1x128xf32>
    %101 = vector.broadcast %100 : vector<1x128xf32> to vector<16x128xf32>
    %102 = arith.addf %99, %101 : vector<16x128xf32>
    %cst_37 = arith.constant 0.000000e+00 : f32
    %103 = vector.broadcast %cst_37 : f32 to vector<16x128xf32>
    %104 = arith.maximumf %102, %103 : vector<16x128xf32>
    %105 = arith.truncf %104 : vector<16x128xf32> to vector<16x128xbf16>
    %c0_38 = arith.constant 0 : index
    %c0_39 = arith.constant 0 : index
    %c0_40 = arith.constant 0 : index
    %106 = vector.load %arg11[%c0_38, %c0_39, %c0_40] : memref<1x16x128xbf16, #tpu.memory_space<vmem>>, vector<1x16x128xbf16>
    %107 = vector.shape_cast %106 : vector<1x16x128xbf16> to vector<16x128xbf16>
    %108 = vector.shape_cast %105 : vector<16x128xbf16> to vector<1x16x128xbf16>
    tpu.vector_store %arg11[%c0_38, %c0_39, %c0_40], %108 {strides = array<i32>} : memref<1x16x128xbf16, #tpu.memory_space<vmem>>, vector<1x16x128xbf16>,
    return
  }
  func.func @transform_0(%arg0: i32, %arg1: i32) -> (i32, i32, i32) {
    %c0_i32 = arith.constant 0 : i32
    %c0_i32_0 = arith.constant 0 : i32
    %c0_i32_1 = arith.constant 0 : i32
    return %arg0, %c0_i32, %c0_i32_0 : i32, i32, i32
  }
  func.func @transform_1(%arg0: i32, %arg1: i32) -> (i32, i32, i32) {
    %c0_i32 = arith.constant 0 : i32
    %c0_i32_0 = arith.constant 0 : i32
    return %arg0, %arg1, %c0_i32 : i32, i32, i32
  }
  func.func @transform_2(%arg0: i32, %arg1: i32) -> (i32, i32, i32) {
    %c0_i32 = arith.constant 0 : i32
    %c0_i32_0 = arith.constant 0 : i32
    %c0_i32_1 = arith.constant 0 : i32
    return %arg0, %c0_i32, %c0_i32_0 : i32, i32, i32
  }
  func.func @transform_3(%arg0: i32, %arg1: i32) -> (i32, i32, i32) {
    %c0_i32 = arith.constant 0 : i32
    %c0_i32_0 = arith.constant 0 : i32
    return %arg0, %arg1, %c0_i32 : i32, i32, i32
  }
  func.func @transform_4(%arg0: i32, %arg1: i32) -> (i32, i32) {
    %c0_i32 = arith.constant 0 : i32
    %c0_i32_0 = arith.constant 0 : i32
    %c0_i32_1 = arith.constant 0 : i32
    return %c0_i32, %c0_i32_0 : i32, i32
  }
  func.func @transform_5(%arg0: i32, %arg1: i32) -> (i32, i32) {
    %c0_i32 = arith.constant 0 : i32
    %c0_i32_0 = arith.constant 0 : i32
    %c0_i32_1 = arith.constant 0 : i32
    return %c0_i32, %c0_i32_0 : i32, i32
  }
  func.func @transform_6(%arg0: i32, %arg1: i32) -> (i32, i32) {
    %c0_i32 = arith.constant 0 : i32
    %c0_i32_0 = arith.constant 0 : i32
    %c0_i32_1 = arith.constant 0 : i32
    return %c0_i32, %c0_i32_0 : i32, i32
  }
  func.func @transform_7(%arg0: i32, %arg1: i32) -> (i32, i32) {
    %c0_i32 = arith.constant 0 : i32
    %c0_i32_0 = arith.constant 0 : i32
    %c0_i32_1 = arith.constant 0 : i32
    return %c0_i32, %c0_i32_0 : i32, i32
  }
  func.func @transform_8(%arg0: i32, %arg1: i32) -> (i32, i32) {
    %c0_i32 = arith.constant 0 : i32
    %c0_i32_0 = arith.constant 0 : i32
    %c0_i32_1 = arith.constant 0 : i32
    return %c0_i32, %c0_i32_0 : i32, i32
  }
  func.func @transform_9(%arg0: i32, %arg1: i32) -> (i32, i32, i32) {
    %c0_i32 = arith.constant 0 : i32
    %c0_i32_0 = arith.constant 0 : i32
    return %arg0, %arg1, %c0_i32 : i32, i32, i32
  }
}

</mosaic_0001>

<llo_original>
// kernel: tpu_custom_call.1
$region0: #{tpu_custom_call.1}
  #allocation0 [shape = 'u32[]', space=smem, size = 0x4, offset = 0x4, fixed_abs, tag = 'smem constant byte address 0x4 - core index']
  #allocation1 [shape = 'u32[144,128]{1,0:T(1,128)}', space=vmem, size = 0x12000, scoped, tag = 'internal scratch']
  %s0 = inlined_call_operand.vmem [shape: f32[2,3,8], index: 0, kind: input, shape index: {}]
  %s1 = inlined_call_operand.vmem [shape: f32[2,16,3], index: 1, kind: input, shape index: {}]
  %s2 = inlined_call_operand.vmem [shape: f32[2,8,8], index: 2, kind: input, shape index: {}]
  %s3 = inlined_call_operand.vmem [shape: f32[2,16,8], index: 3, kind: input, shape index: {}]
  %s4 = inlined_call_operand.vmem [shape: bf16[8,32], index: 4, kind: input, shape index: {}]
  %s5 = inlined_call_operand.vmem [shape: bf16[8,32], index: 5, kind: input, shape index: {}]
  %s6 = inlined_call_operand.vmem [shape: f32[1,32], index: 6, kind: input, shape index: {}]
  %s7 = inlined_call_operand.vmem [shape: bf16[32,128], index: 7, kind: input, shape index: {}]
  %s8 = inlined_call_operand.vmem [shape: f32[1,128], index: 8, kind: input, shape index: {}]
  %s9 = inlined_call_operand.hbm [shape: bf16[2,16,128], index: 9, kind: output, shape index: {}]
  %s10 = sld [smem:[#allocation0]]
  $region69: #{tpu_custom_call.1} parent=0
    _
  %s12 = ssub.s32 1, %s10
  %s13 = scalar_select 0, %s12, %s10
  $region1: #{tpu_custom_call.1} parent=0
    #allocation2 [shape = 'u8[8192]{0}', space=vmem, size = 0x2000, scoped, tag = 'output window, operand 0']
    #allocation3 [shape = 's32[2]{0}', space=sflag, size = 0x8, scoped, tag = 'scoped memory for tpu_custom_call.1']
    %14 = vsyncpa [#allocation3], 0
    %s15 = scalar_lea.sflag [#allocation3], 1
    %16 = vsyncpa %s15, 0
    loop: start=0, step=1, limit=4
    $region2: #{tpu_custom_call.1} parent=1 // loop_pre_header
      _
    $region3: #{tpu_custom_call.1} parent=1 // loop_header
      %s18 = sphi 0, %s22
      %p19 = scmp.ge.s32.totalorder %s18, 4
      %s25 = sphi 0, %s37
      %s26 = sphi 0, %s33
      %s27 = sphi 0, %s25
      %s28 = sphi 0, %s26
      %s29 = sphi 0, %s27
      %s30 = sphi 0, %s28
      %s40 = sphi 0, %s42
      %s43 = sphi 0, %s40
      %s44 = sphi 0, %s43
      %s60 = sphi 0, %s44
      %s68 = sphi 0, %s70
      %s71 = sphi 0, %s68
      %s72 = sphi 0, %s71
      %s88 = sphi 0, %s72
      %s94 = sphi 0, %s96
      %s97 = sphi 0, %s94
      %s98 = sphi 0, %s97
      %s114 = sphi 0, %s98
      %s122 = sphi 0, %s124
      %s125 = sphi 0, %s122
      %s126 = sphi 0, %s125
      %s142 = sphi 0, %s126
      %s146 = sphi 0, %s146
      %s148 = sphi 0, %s146
      %s149 = sphi 0, %s148
      %s163 = sphi 0, %s149
      %s167 = sphi 0, %s167
      %s169 = sphi 0, %s167
      %s170 = sphi 0, %s169
      %s184 = sphi 0, %s170
      %s188 = sphi 0, %s188
      %s190 = sphi 0, %s188
      %s191 = sphi 0, %s190
      %s205 = sphi 0, %s191
      %s209 = sphi 0, %s209
      %s211 = sphi 0, %s209
      %s212 = sphi 0, %s211
      %s226 = sphi 0, %s212
      %s230 = sphi 0, %s230
      %s232 = sphi 0, %s230
      %s233 = sphi 0, %s232
      %s247 = sphi 0, %s233
      %s255 = sphi 0, %s257
      %s258 = sphi 0, %s255
      %s259 = sphi 0, %s258
      %s275 = sphi 0, %s259
    $region4: #{tpu_custom_call.1} parent=1 // loop_header_branch
      %21 = sbr.rel (%p19) target = $region8
    $region5: #{tpu_custom_call.1} parent=1 // loop_body
      %s23 = ssub.s32 %s18, 1
      %s24 = ssub.s32 %s18, 2
      %s31 = sadd.s32 1, %s26
      %p32 = scmp.ge.s32.totalorder %s31, 1
      %s33 = scalar_select %p32, 0, %s31
      %s34 = sadd.s32 1, %s25
      %s35 = scalar_select %p32, %s34, %s25
      %p36 = scmp.ge.s32.totalorder %s35, 2
      %s37 = scalar_select %p36, 0, %s35
      %s38 = ssub.s32 %s25, %s37
      %p39 = scmp.eq.s32.totalorder %s38, 0
      %s41 = sadd.s32 %s40, 1
      %s42 = scalar_select %p39, %s40, %s41
      %p45 = pneg %p39
      %p46 = scmp.eq.s32.totalorder %s18, 1
      %p47 = por %p45, %p46
      %p48 = scmp.ne.s32.totalorder %s40, %s43
      %p49 = scmp.eq.s32.totalorder %s18, 0
      %p50 = por %p48, %p49
      %p51 = scmp.ne.s32.totalorder %s40, %s43
      %p52 = scmp.eq.s32.totalorder %s23, 1
      %p53 = por %p51, %p52
      %p54 = scmp.ne.s32.totalorder %s43, %s44
      %p55 = scmp.eq.s32.totalorder %s23, 0
      %p56 = por %p54, %p55
      %p57 = scmp.ne.s32.totalorder %s43, %s44
      %p58 = scmp.eq.s32.totalorder %s24, 1
      %p59 = por %p57, %p58
      %p61 = scmp.ne.s32.totalorder %s44, %s60
      %p62 = scmp.eq.s32.totalorder %s24, 0
      %p63 = por %p61, %p62
      %s64 = ssub.s32 %s25, %s37
      %s65 = ssub.s32 %s26, %s33
      %s66 = sor.u32 %s64, %s65
      %p67 = scmp.eq.s32.totalorder %s66, 0
      %s69 = sadd.s32 %s68, 1
      %s70 = scalar_select %p67, %s68, %s69
      %p73 = pneg %p67
      %p74 = scmp.eq.s32.totalorder %s18, 1
      %p75 = por %p73, %p74
      %p76 = scmp.ne.s32.totalorder %s68, %s71
      %p77 = scmp.eq.s32.totalorder %s18, 0
      %p78 = por %p76, %p77
      %p79 = scmp.ne.s32.totalorder %s68, %s71
      %p80 = scmp.eq.s32.totalorder %s23, 1
      %p81 = por %p79, %p80
      %p82 = scmp.ne.s32.totalorder %s71, %s72
      %p83 = scmp.eq.s32.totalorder %s23, 0
      %p84 = por %p82, %p83
      %p85 = scmp.ne.s32.totalorder %s71, %s72
      %p86 = scmp.eq.s32.totalorder %s24, 1
      %p87 = por %p85, %p86
      %p89 = scmp.ne.s32.totalorder %s72, %s88
      %p90 = scmp.eq.s32.totalorder %s24, 0
      %p91 = por %p89, %p90
      %s92 = ssub.s32 %s25, %s37
      %p93 = scmp.eq.s32.totalorder %s92, 0
      %s95 = sadd.s32 %s94, 1
      %s96 = scalar_select %p93, %s94, %s95
      %p99 = pneg %p93
      %p100 = scmp.eq.s32.totalorder %s18, 1
      %p101 = por %p99, %p100
      %p102 = scmp.ne.s32.totalorder %s94, %s97
      %p103 = scmp.eq.s32.totalorder %s18, 0
      %p104 = por %p102, %p103
      %p105 = scmp.ne.s32.totalorder %s94, %s97
      %p106 = scmp.eq.s32.totalorder %s23, 1
      %p107 = por %p105, %p106
      %p108 = scmp.ne.s32.totalorder %s97, %s98
      %p109 = scmp.eq.s32.totalorder %s23, 0
      %p110 = por %p108, %p109
      %p111 = scmp.ne.s32.totalorder %s97, %s98
      %p112 = scmp.eq.s32.totalorder %s24, 1
      %p113 = por %p111, %p112
      %p115 = scmp.ne.s32.totalorder %s98, %s114
      %p116 = scmp.eq.s32.totalorder %s24, 0
      %p117 = por %p115, %p116
      %s118 = ssub.s32 %s25, %s37
      %s119 = ssub.s32 %s26, %s33
      %s120 = sor.u32 %s118, %s119
      %p121 = scmp.eq.s32.totalorder %s120, 0
      %s123 = sadd.s32 %s122, 1
      %s124 = scalar_select %p121, %s122, %s123
      %p127 = pneg %p121
      %p128 = scmp.eq.s32.totalorder %s18, 1
      %p129 = por %p127, %p128
      %p130 = scmp.ne.s32.totalorder %s122, %s125
      %p131 = scmp.eq.s32.totalorder %s18, 0
      %p132 = por %p130, %p131
      %p133 = scmp.ne.s32.totalorder %s122, %s125
      %p134 = scmp.eq.s32.totalorder %s23, 1
      %p135 = por %p133, %p134
      %p136 = scmp.ne.s32.totalorder %s125, %s126
      %p137 = scmp.eq.s32.totalorder %s23, 0
      %p138 = por %p136, %p137
      %p139 = scmp.ne.s32.totalorder %s125, %s126
      %p140 = scmp.eq.s32.totalorder %s24, 1
      %p141 = por %p139, %p140
      %p143 = scmp.ne.s32.totalorder %s126, %s142
      %p144 = scmp.eq.s32.totalorder %s24, 0
      %p145 = por %p143, %p144
      %s147 = sadd.s32 %s146, 1
      %p150 = scmp.eq.s32.totalorder %s18, 1
      %p151 = scmp.ne.s32.totalorder %s146, %s148
      %p152 = scmp.eq.s32.totalorder %s18, 0
      %p153 = por %p151, %p152
      %p154 = scmp.ne.s32.totalorder %s146, %s148
      %p155 = scmp.eq.s32.totalorder %s23, 1
      %p156 = por %p154, %p155
      %p157 = scmp.ne.s32.totalorder %s148, %s149
      %p158 = scmp.eq.s32.totalorder %s23, 0
      %p159 = por %p157, %p158
      %p160 = scmp.ne.s32.totalorder %s148, %s149
      %p161 = scmp.eq.s32.totalorder %s24, 1
      %p162 = por %p160, %p161
      %p164 = scmp.ne.s32.totalorder %s149, %s163
      %p165 = scmp.eq.s32.totalorder %s24, 0
      %p166 = por %p164, %p165
      %s168 = sadd.s32 %s167, 1
      %p171 = scmp.eq.s32.totalorder %s18, 1
      %p172 = scmp.ne.s32.totalorder %s167, %s169
      %p173 = scmp.eq.s32.totalorder %s18, 0
      %p174 = por %p172, %p173
      %p175 = scmp.ne.s32.totalorder %s167, %s169
      %p176 = scmp.eq.s32.totalorder %s23, 1
      %p177 = por %p175, %p176
      %p178 = scmp.ne.s32.totalorder %s169, %s170
      %p179 = scmp.eq.s32.totalorder %s23, 0
      %p180 = por %p178, %p179
      %p181 = scmp.ne.s32.totalorder %s169, %s170
      %p182 = scmp.eq.s32.totalorder %s24, 1
      %p183 = por %p181, %p182
      %p185 = scmp.ne.s32.totalorder %s170, %s184
      %p186 = scmp.eq.s32.totalorder %s24, 0
      %p187 = por %p185, %p186
      %s189 = sadd.s32 %s188, 1
      %p192 = scmp.eq.s32.totalorder %s18, 1
      %p193 = scmp.ne.s32.totalorder %s188, %s190
      %p194 = scmp.eq.s32.totalorder %s18, 0
      %p195 = por %p193, %p194
      %p196 = scmp.ne.s32.totalorder %s188, %s190
      %p197 = scmp.eq.s32.totalorder %s23, 1
      %p198 = por %p196, %p197
      %p199 = scmp.ne.s32.totalorder %s190, %s191
      %p200 = scmp.eq.s32.totalorder %s23, 0
      %p201 = por %p199, %p200
      %p202 = scmp.ne.s32.totalorder %s190, %s191
      %p203 = scmp.eq.s32.totalorder %s24, 1
      %p204 = por %p202, %p203
      %p206 = scmp.ne.s32.totalorder %s191, %s205
      %p207 = scmp.eq.s32.totalorder %s24, 0
      %p208 = por %p206, %p207
      %s210 = sadd.s32 %s209, 1
      %p213 = scmp.eq.s32.totalorder %s18, 1
      %p214 = scmp.ne.s32.totalorder %s209, %s211
      %p215 = scmp.eq.s32.totalorder %s18, 0
      %p216 = por %p214, %p215
      %p217 = scmp.ne.s32.totalorder %s209, %s211
      %p218 = scmp.eq.s32.totalorder %s23, 1
      %p219 = por %p217, %p218
      %p220 = scmp.ne.s32.totalorder %s211, %s212
      %p221 = scmp.eq.s32.totalorder %s23, 0
      %p222 = por %p220, %p221
      %p223 = scmp.ne.s32.totalorder %s211, %s212
      %p224 = scmp.eq.s32.totalorder %s24, 1
      %p225 = por %p223, %p224
      %p227 = scmp.ne.s32.totalorder %s212, %s226
      %p228 = scmp.eq.s32.totalorder %s24, 0
      %p229 = por %p227, %p228
      %s231 = sadd.s32 %s230, 1
      %p234 = scmp.eq.s32.totalorder %s18, 1
      %p235 = scmp.ne.s32.totalorder %s230, %s232
      %p236 = scmp.eq.s32.totalorder %s18, 0
      %p237 = por %p235, %p236
      %p238 = scmp.ne.s32.totalorder %s230, %s232
      %p239 = scmp.eq.s32.totalorder %s23, 1
      %p240 = por %p238, %p239
      %p241 = scmp.ne.s32.totalorder %s232, %s233
      %p242 = scmp.eq.s32.totalorder %s23, 0
      %p243 = por %p241, %p242
      %p244 = scmp.ne.s32.totalorder %s232, %s233
      %p245 = scmp.eq.s32.totalorder %s24, 1
      %p246 = por %p244, %p245
      %p248 = scmp.ne.s32.totalorder %s233, %s247
      %p249 = scmp.eq.s32.totalorder %s24, 0
      %p250 = por %p248, %p249
      %s251 = ssub.s32 %s25, %s37
      %s252 = ssub.s32 %s26, %s33
      %s253 = sor.u32 %s251, %s252
      %p254 = scmp.eq.s32.totalorder %s253, 0
      %s256 = sadd.s32 %s255, 1
      %s257 = scalar_select %p254, %s255, %s256
      %p260 = pneg %p254
      %p261 = scmp.eq.s32.totalorder %s18, 1
      %p262 = por %p260, %p261
      %p263 = scmp.ne.s32.totalorder %s255, %s258
      %p264 = scmp.eq.s32.totalorder %s18, 0
      %p265 = por %p263, %p264
      %p266 = scmp.ne.s32.totalorder %s255, %s258
      %p267 = scmp.eq.s32.totalorder %s23, 1
      %p268 = por %p266, %p267
      %p269 = scmp.ne.s32.totalorder %s258, %s259
      %p270 = scmp.eq.s32.totalorder %s23, 0
      %p271 = por %p269, %p270
      %p272 = scmp.ne.s32.totalorder %s258, %s259
      %p273 = scmp.eq.s32.totalorder %s24, 1
      %p274 = por %p272, %p273
      %p276 = scmp.ne.s32.totalorder %s259, %s275
      %p277 = scmp.eq.s32.totalorder %s24, 0
      %p278 = por %p276, %p277
      %p279 = scmp.le.s32.totalorder 1, %s18
      %p280 = scmp.lt.s32.totalorder %s18, 3
      %p281 = pnand %p279, %p280
      %p282 = pneg %p281
      // Predicated region
      $region9: #{tpu_custom_call.1} parent=5 // pred_check
        _
      $region10: #{tpu_custom_call.1} parent=5 // pred_check_branch
        %284 = sbr.rel (%p281) target = $region12
      $region11: #{tpu_custom_call.1} parent=5 // pred_region
        %s285 = ssub.s32 %s18, 1
        // Predicated region
        $region13: #{tpu_custom_call.1} parent=11 // pred_check
          %p286 = pneg %p159
        $region14: #{tpu_custom_call.1} parent=11 // pred_check_branch
          %288 = sbr.rel (%p286) target = $region16
        $region15: #{tpu_custom_call.1} parent=11 // pred_region
          _
        $region16: #{tpu_custom_call.1} parent=11 // pred_fallthru
          _
        // Predicated region
        $region17: #{tpu_custom_call.1} parent=11 // pred_check
          %p289 = pneg %p180
        $region18: #{tpu_custom_call.1} parent=11 // pred_check_branch
          %291 = sbr.rel (%p289) target = $region20
        $region19: #{tpu_custom_call.1} parent=11 // pred_region
          _
        $region20: #{tpu_custom_call.1} parent=11 // pred_fallthru
          _
        // Predicated region
        $region21: #{tpu_custom_call.1} parent=11 // pred_check
          %p292 = pneg %p201
        $region22: #{tpu_custom_call.1} parent=11 // pred_check_branch
          %294 = sbr.rel (%p292) target = $region24
        $region23: #{tpu_custom_call.1} parent=11 // pred_region
          _
        $region24: #{tpu_custom_call.1} parent=11 // pred_fallthru
          _
        // Predicated region
        $region25: #{tpu_custom_call.1} parent=11 // pred_check
          %p295 = pneg %p222
        $region26: #{tpu_custom_call.1} parent=11 // pred_check_branch
          %297 = sbr.rel (%p295) target = $region28
        $region27: #{tpu_custom_call.1} parent=11 // pred_region
          _
        $region28: #{tpu_custom_call.1} parent=11 // pred_fallthru
          _
        // Predicated region
        $region29: #{tpu_custom_call.1} parent=11 // pred_check
          %p298 = pneg %p243
        $region30: #{tpu_custom_call.1} parent=11 // pred_check_branch
          %300 = sbr.rel (%p298) target = $region32
        $region31: #{tpu_custom_call.1} parent=11 // pred_region
          _
        $region32: #{tpu_custom_call.1} parent=11 // pred_fallthru
          _
      $region12: #{tpu_custom_call.1} parent=5 // pred_fallthru
        _
      %p301 = scmp.lt.s32.totalorder %s18, 2
      // Predicated region
      $region33: #{tpu_custom_call.1} parent=5 // pred_check
        %p302 = pneg %p301
      $region34: #{tpu_custom_call.1} parent=5 // pred_check_branch
        %304 = sbr.rel (%p302) target = $region36
      $region35: #{tpu_custom_call.1} parent=5 // pred_region
        // Predicated region
        $region37: #{tpu_custom_call.1} parent=35 // pred_check
          %p305 = pneg %p50
        $region38: #{tpu_custom_call.1} parent=35 // pred_check_branch
          %307 = sbr.rel (%p305) target = $region40
        $region39: #{tpu_custom_call.1} parent=35 // pred_region
          %p308 = scmp.lt.s32.totalorder %s25, 1
          %s309 = scalar_select %p308, %s25, 1
          %s310 = smul.addr %s309, 4
          %s311 = scalar_lea.vmem %s0, %s310
        $region40: #{tpu_custom_call.1} parent=35 // pred_fallthru
          _
        // Predicated region
        $region41: #{tpu_custom_call.1} parent=35 // pred_check
          %p312 = pneg %p78
        $region42: #{tpu_custom_call.1} parent=35 // pred_check_branch
          %314 = sbr.rel (%p312) target = $region44
        $region43: #{tpu_custom_call.1} parent=35 // pred_region
          %s315 = smul.u32 2, %s26
          %p316 = scmp.lt.s32.totalorder %s25, 1
          %s317 = scalar_select %p316, %s25, 1
          %p318 = scmp.lt.s32.totalorder %s315, 1
          %s319 = scalar_select %p318, %s315, 1
          %s320 = smul.addr %s317, 2
          %s321 = sadd.s32 %s319, %s320
          %s322 = smul.addr %s321, 8
          %s323 = scalar_lea.vmem %s1, %s322
          %s324 = smul.u32 2, %s26
        $region44: #{tpu_custom_call.1} parent=35 // pred_fallthru
          _
        // Predicated region
        $region45: #{tpu_custom_call.1} parent=35 // pred_check
          %p325 = pneg %p104
        $region46: #{tpu_custom_call.1} parent=35 // pred_check_branch
          %327 = sbr.rel (%p325) target = $region48
        $region47: #{tpu_custom_call.1} parent=35 // pred_region
          %p328 = scmp.lt.s32.totalorder %s25, 1
          %s329 = scalar_select %p328, %s25, 1
          %s330 = smul.addr %s329, 8
          %s331 = scalar_lea.vmem %s2, %s330
        $region48: #{tpu_custom_call.1} parent=35 // pred_fallthru
          _
        // Predicated region
        $region49: #{tpu_custom_call.1} parent=35 // pred_check
          %p332 = pneg %p132
        $region50: #{tpu_custom_call.1} parent=35 // pred_check_branch
          %334 = sbr.rel (%p332) target = $region52
        $region51: #{tpu_custom_call.1} parent=35 // pred_region
          %s335 = smul.u32 2, %s26
          %p336 = scmp.lt.s32.totalorder %s25, 1
          %s337 = scalar_select %p336, %s25, 1
          %p338 = scmp.lt.s32.totalorder %s335, 1
          %s339 = scalar_select %p338, %s335, 1
          %s340 = smul.addr %s337, 2
          %s341 = sadd.s32 %s339, %s340
          %s342 = smul.addr %s341, 8
          %s343 = scalar_lea.vmem %s3, %s342
          %s344 = smul.u32 2, %s26
        $region52: #{tpu_custom_call.1} parent=35 // pred_fallthru
          _
      $region36: #{tpu_custom_call.1} parent=5 // pred_fallthru
        _
      %p345 = scmp.le.s32.totalorder 1, %s18
      %p346 = scmp.lt.s32.totalorder %s18, 3
      %p347 = pnand %p345, %p346
      %p348 = pneg %p347
      // Predicated region
      $region53: #{tpu_custom_call.1} parent=5 // pred_check
        _
      $region54: #{tpu_custom_call.1} parent=5 // pred_check_branch
        %350 = sbr.rel (%p347) target = $region56
      $region55: #{tpu_custom_call.1} parent=5 // pred_region
        %s351 = ssub.s32 %s18, 1
        %p352 = scmp.lt.s32.totalorder %s27, 1
        %s353 = scalar_select %p352, %s27, 1
        %s354 = smul.addr %s353, 4
        %s355 = scalar_lea.vmem %s0, %s354
        %p356 = pneg %p56
        %p357 = pneg %p53
        %s358 = smul.u32 2, %s28
        %p359 = scmp.lt.s32.totalorder %s27, 1
        %s360 = scalar_select %p359, %s27, 1
        %p361 = scmp.lt.s32.totalorder %s358, 1
        %s362 = scalar_select %p361, %s358, 1
        %s363 = smul.addr %s360, 2
        %s364 = sadd.s32 %s362, %s363
        %s365 = smul.addr %s364, 8
        %s366 = scalar_lea.vmem %s1, %s365
        %p367 = pneg %p84
        %p368 = pneg %p81
        %p369 = scmp.lt.s32.totalorder %s27, 1
        %s370 = scalar_select %p369, %s27, 1
        %s371 = smul.addr %s370, 8
        %s372 = scalar_lea.vmem %s2, %s371
        %p373 = pneg %p110
        %p374 = pneg %p107
        %s375 = smul.u32 2, %s28
        %p376 = scmp.lt.s32.totalorder %s27, 1
        %s377 = scalar_select %p376, %s27, 1
        %p378 = scmp.lt.s32.totalorder %s375, 1
        %s379 = scalar_select %p378, %s375, 1
        %s380 = smul.addr %s377, 2
        %s381 = sadd.s32 %s379, %s380
        %s382 = smul.addr %s381, 8
        %s383 = scalar_lea.vmem %s3, %s382
        %p384 = pneg %p138
        %p385 = pneg %p135
        %p386 = pneg %p159
        %p387 = pneg %p156
        %p388 = pneg %p180
        %p389 = pneg %p177
        %p390 = pneg %p201
        %p391 = pneg %p198
        %p392 = pneg %p222
        %p393 = pneg %p219
        %p394 = pneg %p243
        %p395 = pneg %p240
        %p396 = pneg %p271
        %p397 = pneg %p268
        %s398 = sand.u32 %s258, 1
        %s399 = scalar_lea.sflag [#allocation3], %s398
        %s400 = sand.u32 %s258, 1
        %s401 = smul.addr %s400, 8
        %s402 = scalar_lea.vmem [#allocation2], %s401
        %p403 = scmp.lt.s32.totalorder %s27, 1
        %s404 = scalar_select %p403, %s27, 1
        %s405 = smul.addr %s404, 4
        %s406 = scalar_lea.vmem %s0, %s405
        %s407 = smul.u32 2, %s28
        %p408 = scmp.lt.s32.totalorder %s27, 1
        %s409 = scalar_select %p408, %s27, 1
        %p410 = scmp.lt.s32.totalorder %s407, 1
        %s411 = scalar_select %p410, %s407, 1
        %s412 = smul.addr %s409, 2
        %s413 = sadd.s32 %s411, %s412
        %s414 = smul.addr %s413, 8
        %s415 = scalar_lea.vmem %s1, %s414
        %s416 = smul.u32 2, %s28
        %p417 = scmp.lt.s32.totalorder %s27, 1
        %s418 = scalar_select %p417, %s27, 1
        %s419 = smul.addr %s418, 8
        %s420 = scalar_lea.vmem %s2, %s419
        %s421 = smul.u32 2, %s28
        %p422 = scmp.lt.s32.totalorder %s27, 1
        %s423 = scalar_select %p422, %s27, 1
        %p424 = scmp.lt.s32.totalorder %s421, 1
        %s425 = scalar_select %p424, %s421, 1
        %s426 = smul.addr %s423, 2
        %s427 = sadd.s32 %s425, %s426
        %s428 = smul.addr %s427, 8
        %s429 = scalar_lea.vmem %s3, %s428
        %s430 = smul.u32 2, %s28
        %s431 = smul.u32 2, %s28
        %v433 = vld [vmem:[%s406] sm:$0x7]
        %v434 = vld [vmem:[%s415] sm:$0xff]
        %v435 = vld [vmem:[%s415 + $0x8] sm:$0xff]
        %v436 = vld [vmem:[%s420] sm:$0xff]
        %v437 = vld [vmem:[%s429] sm:$0xff]
        %v438 = vld [vmem:[%s429 + $0x8] sm:$0xff]
        %v439 = vpack.c.bf16 %v435, %v434
        %v440 = vunpack.c.l.bf16 %v439
        %v441 = vunpack.c.h.bf16 %v439
        %v442 = vsub.f32 %v434, %v440
        %v443 = vsub.f32 %v435, %v441
        %v444 = vpack.c.bf16 %v443, %v442
        %v445 = vpack.c.bf16 %v433, %v433
        %v446 = vunpack.c.l.bf16 %v445
        %v447 = vsub.f32 %v433, %v446
        %v448 = vpack.c.bf16 %v447, %v447
        %vm449 = vcmask 23552
        %v451 = vsel %vm449, %v444, 0
        %vm453 = vcmask 1040384
        %vm454 = vcmask 1041408
        %v455 = vsel %vm453, 4294967295, 65535
        %v456 = vsel %vm454, %v455, 0
        %v458 = vand.u32 %v445, %v456
        %460 = vmatprep.subr.bf16.mxu0 0
        %461 = vmatpush1.bf16.msra.mxu0 0
        %462 = vmatprep.subr.bf16.mxu0 0
        %463 = vmatpush1.bf16.msra.mxu0 0
        %464 = vmatprep.subr.bf16.mxu0 0
        %465 = vmatpush1.bf16.msra.mxu0 0
        %466 = vmatprep.subr.bf16.mxu0 0
        %467 = vmatpush1.bf16.msra.mxu0 0
        %468 = vmatprep.subr.bf16.mxu0 0
        %469 = vmatpush1.bf16.msra.mxu0 0
        %470 = vmatprep.subr.bf16.mxu0 0
        %471 = vmatpush1.bf16.msra.mxu0 0
        %472 = vmatprep.subr.bf16.mxu0 0
        %473 = vmatpush1.bf16.msra.mxu0 0
        %474 = vmatprep.subr.bf16.mxu0 0
        %475 = vmatpush1.bf16.msra.mxu0 %v458
        %476 = vmatprep.subr.bf16.mxu0 0
        %477 = vmatpush2.bf16.msra.mxu0 0
        %478 = vmatprep.subr.bf16.mxu0 0
        %479 = vmatpush2.bf16.msra.mxu0 0
        %480 = vmatprep.subr.bf16.mxu0 0
        %481 = vmatpush2.bf16.msra.mxu0 0
        %482 = vmatprep.subr.bf16.mxu0 0
        %483 = vmatpush2.bf16.msra.mxu0 0
        %484 = vmatprep.subr.bf16.mxu0 0
        %485 = vmatpush2.bf16.msra.mxu0 0
        %486 = vmatprep.subr.bf16.mxu0 0
        %487 = vmatpush2.bf16.msra.mxu0 0
        %488 = vmatprep.subr.bf16.mxu0 0
        %489 = vmatpush2.bf16.msra.mxu0 0
        %490 = vmatprep.subr.bf16.mxu0 0
        %491 = vmatpush2.bf16.msra.mxu0 0
        %492 = vmatprep.mubr.bf16.mxu0 0
        %493 = vmatmul.mubr.bf16.gmra.mxu0 %v451
        %v494 = vpop.f32.mrf.mxu0
        %v495 = vadd.f32 0.0, %v494
        %v496 = vpop.f32.mrf.mxu0
        %v497 = vpop.f32.mrf.mxu0
        %v498 = vadd.f32 0.0, %v497
        %v499 = vpop.f32.mrf.mxu0
        %500 = vdwg.mxu0
        %v502 = vsel %vm449, %v439, 0
        %504 = vmatprep.subr.bf16.mxu0 0
        %505 = vmatpush1.bf16.msra.mxu0 0
        %506 = vmatprep.subr.bf16.mxu0 0
        %507 = vmatpush1.bf16.msra.mxu0 0
        %508 = vmatprep.subr.bf16.mxu0 0
        %509 = vmatpush1.bf16.msra.mxu0 0
        %510 = vmatprep.subr.bf16.mxu0 0
        %511 = vmatpush1.bf16.msra.mxu0 0
        %512 = vmatprep.subr.bf16.mxu0 0
        %513 = vmatpush1.bf16.msra.mxu0 0
        %514 = vmatprep.subr.bf16.mxu0 0
        %515 = vmatpush1.bf16.msra.mxu0 0
        %516 = vmatprep.subr.bf16.mxu0 0
        %517 = vmatpush1.bf16.msra.mxu0 0
        %518 = vmatprep.subr.bf16.mxu0 0
        %519 = vmatpush1.bf16.msra.mxu0 %v458
        %520 = vmatprep.subr.bf16.mxu0 0
        %521 = vmatpush2.bf16.msra.mxu0 0
        %522 = vmatprep.subr.bf16.mxu0 0
        %523 = vmatpush2.bf16.msra.mxu0 0
        %524 = vmatprep.subr.bf16.mxu0 0
        %525 = vmatpush2.bf16.msra.mxu0 0
        %526 = vmatprep.subr.bf16.mxu0 0
        %527 = vmatpush2.bf16.msra.mxu0 0
        %528 = vmatprep.subr.bf16.mxu0 0
        %529 = vmatpush2.bf16.msra.mxu0 0
        %530 = vmatprep.subr.bf16.mxu0 0
        %531 = vmatpush2.bf16.msra.mxu0 0
        %532 = vmatprep.subr.bf16.mxu0 0
        %533 = vmatpush2.bf16.msra.mxu0 0
        %534 = vmatprep.subr.bf16.mxu0 0
        %535 = vmatpush2.bf16.msra.mxu0 0
        %536 = vmatprep.mubr.bf16.mxu0 0
        %537 = vmatmul.mubr.bf16.gmra.mxu0 %v502
        %v538 = vpop.f32.mrf.mxu0
        %v539 = vadd.f32 %v495, %v538
        %v540 = vpop.f32.mrf.mxu0
        %v541 = vpop.f32.mrf.mxu0
        %v542 = vadd.f32 %v498, %v541
        %v543 = vpop.f32.mrf.mxu0
        %544 = vdwg.mxu0
        %v546 = vand.u32 %v448, %v456
        %548 = vmatprep.subr.bf16.mxu0 0
        %549 = vmatpush1.bf16.msra.mxu0 0
        %550 = vmatprep.subr.bf16.mxu0 0
        %551 = vmatpush1.bf16.msra.mxu0 0
        %552 = vmatprep.subr.bf16.mxu0 0
        %553 = vmatpush1.bf16.msra.mxu0 0
        %554 = vmatprep.subr.bf16.mxu0 0
        %555 = vmatpush1.bf16.msra.mxu0 0
        %556 = vmatprep.subr.bf16.mxu0 0
        %557 = vmatpush1.bf16.msra.mxu0 0
        %558 = vmatprep.subr.bf16.mxu0 0
        %559 = vmatpush1.bf16.msra.mxu0 0
        %560 = vmatprep.subr.bf16.mxu0 0
        %561 = vmatpush1.bf16.msra.mxu0 0
        %562 = vmatprep.subr.bf16.mxu0 0
        %563 = vmatpush1.bf16.msra.mxu0 %v546
        %564 = vmatprep.subr.bf16.mxu0 0
        %565 = vmatpush2.bf16.msra.mxu0 0
        %566 = vmatprep.subr.bf16.mxu0 0
        %567 = vmatpush2.bf16.msra.mxu0 0
        %568 = vmatprep.subr.bf16.mxu0 0
        %569 = vmatpush2.bf16.msra.mxu0 0
        %570 = vmatprep.subr.bf16.mxu0 0
        %571 = vmatpush2.bf16.msra.mxu0 0
        %572 = vmatprep.subr.bf16.mxu0 0
        %573 = vmatpush2.bf16.msra.mxu0 0
        %574 = vmatprep.subr.bf16.mxu0 0
        %575 = vmatpush2.bf16.msra.mxu0 0
        %576 = vmatprep.subr.bf16.mxu0 0
        %577 = vmatpush2.bf16.msra.mxu0 0
        %578 = vmatprep.subr.bf16.mxu0 0
        %579 = vmatpush2.bf16.msra.mxu0 0
        %580 = vmatprep.mubr.bf16.mxu0 0
        %581 = vmatmul.mubr.bf16.gmra.mxu0 %v502
        %v582 = vpop.f32.mrf.mxu0
        %v583 = vadd.f32 0.0, %v582
        %v584 = vpop.f32.mrf.mxu0
        %v585 = vpop.f32.mrf.mxu0
        %v586 = vadd.f32 0.0, %v585
        %v587 = vpop.f32.mrf.mxu0
        %588 = vdwg.mxu0
        %v589 = vadd.f32 %v539, %v583
        %v590 = vadd.f32 %v542, %v586
        %v591 = vmul.f32 %v434, %v434
        %v592 = vmul.f32 %v435, %v435
        %595 = vrot.lane.b32.xlu0 %v591, 127
        %v596 = vpop.permute.xlu0 %595
        %597 = vrot.lane.b32.xlu0 %v592, 127
        %v598 = vpop.permute.xlu0 %597
        %v601 = vadd.f32 %v591, %v596
        %v602 = vadd.f32 %v592, %v598
        %603 = vrot.lane.b32.xlu0 %v591, 126
        %v604 = vpop.permute.xlu0 %603
        %605 = vrot.lane.b32.xlu0 %v592, 126
        %v606 = vpop.permute.xlu0 %605
        %v609 = vadd.f32 %v601, %v604
        %v610 = vadd.f32 %v602, %v606
        %v611 = vmul.f32 %v433, %v433
        %v613 = vrot.slane %v611, 1
        %v615 = vadd.f32 %v611, %v613
        %v616 = vrot.slane %v611, 2
        %v618 = vadd.f32 %v615, %v616
        %620 = vset.pattern.permute.xlu0 0
        %621 = vperm.xlu0 %620, %v609
        %v622 = vpop.permute.xlu0 %621
        %625 = vset.pattern.permute.xlu0 0
        %626 = vperm.xlu0 %625, %v610
        %v627 = vpop.permute.xlu0 %626
        %v629 = vlaneseq
        %v630 = vshrl.u32 %v629, 7
        %v631 = vsub.s32 0, %v630
        %v632 = vrot.slane %v618, %v631
        %v633 = vadd.f32 %v622, %v632
        %v634 = vadd.f32 %v627, %v632
        %v635 = vmul.f32 %v589, 2.0
        %v636 = vmul.f32 %v590, 2.0
        %v637 = vsub.f32 %v633, %v635
        %v638 = vsub.f32 %v634, %v636
        %v639 = vmax.f32 %v637, 0.0
        %v640 = vmax.f32 %v638, 0.0
        %v641 = vadd.f32 %v639, 1e-08
        %v642 = vadd.f32 %v640, 1e-08
        %v643 = vrcp.pop %v641
        %v644 = vrcp.pop %v642
        %v645 = vlaneseq
        %v646 = vand.u32 %v645, 127
        %v649 = vand.u32 %v639, 4294967288
        %v650 = vand.u32 %v640, 4294967288
        %v651 = vor.u32 %v649, %v646
        %v652 = vor.u32 %v650, %v646
        %vm653 = vcmask 64512
        %v654 = vsel %vm653, %v651, 2147483647
        %v655 = vand.u32 %v654, 65535
        %v656 = vshra.s32 %v654, 16
        %v657 = vcvt.s32.f32 %v655
        %v658 = vcvt.s32.f32 %v656
        %659 = vmin.xlane.f32.xlu0 %v658
        %v660 = vpop.xlane.xlu0 %659
        %vm661 = vcmp.eq.f32.partialorder %v658, %v660
        %v662 = vsel %vm661, %v657, inf
        %663 = vmin.xlane.f32.xlu0 %v662
        %v664 = vpop.xlane.xlu0 %663
        %v665 = vcvt.f32.s32 %v664
        %v666 = vcvt.f32.s32 %v660
        %v667 = vshll.u32 %v666, 16
        %v668 = vadd.s32 %v667, %v665
        %v669 = vsel %vm653, %v652, 2147483647
        %v670 = vand.u32 %v669, 65535
        %v671 = vshra.s32 %v669, 16
        %v672 = vcvt.s32.f32 %v670
        %v673 = vcvt.s32.f32 %v671
        %674 = vmin.xlane.f32.xlu0 %v673
        %v675 = vpop.xlane.xlu0 %674
        %vm676 = vcmp.eq.f32.partialorder %v673, %v675
        %v677 = vsel %vm676, %v672, inf
        %678 = vmin.xlane.f32.xlu0 %v677
        %v679 = vpop.xlane.xlu0 %678
        %v680 = vcvt.f32.s32 %v679
        %v681 = vcvt.f32.s32 %v675
        %v682 = vshll.u32 %v681, 16
        %v683 = vadd.s32 %v682, %v680
        %vm684 = vcmp.eq.s32.totalorder %v651, %v668
        %vm685 = vcmp.eq.s32.totalorder %v652, %v683
        %v686 = vsel %vm684, 2147483647, %v651
        %v687 = vsel %vm685, 2147483647, %v652
        %v688 = vsel %vm653, %v686, 2147483647
        %v689 = vand.u32 %v688, 65535
        %v690 = vshra.s32 %v688, 16
        %v691 = vcvt.s32.f32 %v689
        %v692 = vcvt.s32.f32 %v690
        %693 = vmin.xlane.f32.xlu0 %v692
        %v694 = vpop.xlane.xlu0 %693
        %vm695 = vcmp.eq.f32.partialorder %v692, %v694
        %v696 = vsel %vm695, %v691, inf
        %697 = vmin.xlane.f32.xlu0 %v696
        %v698 = vpop.xlane.xlu0 %697
        %v699 = vcvt.f32.s32 %v698
        %v700 = vcvt.f32.s32 %v694
        %v701 = vshll.u32 %v700, 16
        %v702 = vadd.s32 %v701, %v699
        %v703 = vsel %vm653, %v687, 2147483647
        %v704 = vand.u32 %v703, 65535
        %v705 = vshra.s32 %v703, 16
        %v706 = vcvt.s32.f32 %v704
        %v707 = vcvt.s32.f32 %v705
        %708 = vmin.xlane.f32.xlu0 %v707
        %v709 = vpop.xlane.xlu0 %708
        %vm710 = vcmp.eq.f32.partialorder %v707, %v709
        %v711 = vsel %vm710, %v706, inf
        %712 = vmin.xlane.f32.xlu0 %v711
        %v713 = vpop.xlane.xlu0 %712
        %v714 = vcvt.f32.s32 %v713
        %v715 = vcvt.f32.s32 %v709
        %v716 = vshll.u32 %v715, 16
        %v717 = vadd.s32 %v716, %v714
        %vm718 = vcmp.eq.s32.totalorder %v686, %v702
        %vm719 = vcmp.eq.s32.totalorder %v687, %v717
        %v720 = vsel %vm718, 2147483647, %v686
        %v721 = vsel %vm719, 2147483647, %v687
        %v722 = vsel %vm653, %v720, 2147483647
        %v723 = vand.u32 %v722, 65535
        %v724 = vshra.s32 %v722, 16
        %v725 = vcvt.s32.f32 %v723
        %v726 = vcvt.s32.f32 %v724
        %727 = vmin.xlane.f32.xlu0 %v726
        %v728 = vpop.xlane.xlu0 %727
        %vm729 = vcmp.eq.f32.partialorder %v726, %v728
        %v730 = vsel %vm729, %v725, inf
        %731 = vmin.xlane.f32.xlu0 %v730
        %v732 = vpop.xlane.xlu0 %731
        %v733 = vcvt.f32.s32 %v732
        %v734 = vcvt.f32.s32 %v728
        %v735 = vshll.u32 %v734, 16
        %v736 = vadd.s32 %v735, %v733
        %v737 = vsel %vm653, %v721, 2147483647
        %v738 = vand.u32 %v737, 65535
        %v739 = vshra.s32 %v737, 16
        %v740 = vcvt.s32.f32 %v738
        %v741 = vcvt.s32.f32 %v739
        %742 = vmin.xlane.f32.xlu0 %v741
        %v743 = vpop.xlane.xlu0 %742
        %vm744 = vcmp.eq.f32.partialorder %v741, %v743
        %v745 = vsel %vm744, %v740, inf
        %746 = vmin.xlane.f32.xlu0 %v745
        %v747 = vpop.xlane.xlu0 %746
        %v748 = vcvt.f32.s32 %v747
        %v749 = vcvt.f32.s32 %v743
        %v750 = vshll.u32 %v749, 16
        %v751 = vadd.s32 %v750, %v748
        %vm752 = vcmp.le.s32.totalorder %v651, %v736
        %vm753 = vcmp.le.s32.totalorder %v652, %v751
        %v754 = vsel %vm752, %v643, 0.0
        %v755 = vsel %vm753, %v644, 0.0
        %v756 = vsel %vm653, %v754, 0.0
        %757 = vadd.xlane.f32.xlu0 %v756
        %v758 = vpop.xlane.xlu0 %757
        %v759 = vsel %vm653, %v755, 0.0
        %760 = vadd.xlane.f32.xlu0 %v759
        %v761 = vpop.xlane.xlu0 %760
        %v762 = vrcp.pop %v758
        %v763 = vrcp.pop %v761
        %v764 = vmul.f32 %v754, %v762
        %v765 = vmul.f32 %v755, %v763
        %v766 = vpack.c.bf16 %v765, %v764
        %v767 = vpack.c.bf16 %v436, %v436
        %v769 = vsel %vm653, %v766, 0
        %vm771 = vcmask 1043456
        %v773 = vsel %vm771, %v767, 0
        %775 = vmatprep.subr.bf16.mxu0 0
        %776 = vmatpush1.bf16.msra.mxu0 0
        %777 = vmatprep.subr.bf16.mxu0 0
        %778 = vmatpush1.bf16.msra.mxu0 0
        %779 = vmatprep.subr.bf16.mxu0 0
        %780 = vmatpush1.bf16.msra.mxu0 0
        %781 = vmatprep.subr.bf16.mxu0 0
        %782 = vmatpush1.bf16.msra.mxu0 0
        %783 = vmatprep.subr.bf16.mxu0 0
        %784 = vmatpush1.bf16.msra.mxu0 0
        %785 = vmatprep.subr.bf16.mxu0 0
        %786 = vmatpush1.bf16.msra.mxu0 0
        %787 = vmatprep.subr.bf16.mxu0 0
        %788 = vmatpush1.bf16.msra.mxu0 0
        %789 = vmatprep.subr.bf16.mxu0 0
        %790 = vmatpush1.bf16.msra.mxu0 %v773
        %791 = vmatprep.subr.bf16.mxu0 0
        %792 = vmatpush2.bf16.msra.mxu0 0
        %793 = vmatprep.subr.bf16.mxu0 0
        %794 = vmatpush2.bf16.msra.mxu0 0
        %795 = vmatprep.subr.bf16.mxu0 0
        %796 = vmatpush2.bf16.msra.mxu0 0
        %797 = vmatprep.subr.bf16.mxu0 0
        %798 = vmatpush2.bf16.msra.mxu0 0
        %799 = vmatprep.subr.bf16.mxu0 0
        %800 = vmatpush2.bf16.msra.mxu0 0
        %801 = vmatprep.subr.bf16.mxu0 0
        %802 = vmatpush2.bf16.msra.mxu0 0
        %803 = vmatprep.subr.bf16.mxu0 0
        %804 = vmatpush2.bf16.msra.mxu0 0
        %805 = vmatprep.subr.bf16.mxu0 0
        %806 = vmatpush2.bf16.msra.mxu0 0
        %807 = vmatprep.mubr.bf16.mxu0 0
        %808 = vmatmul.mubr.bf16.gmra.mxu0 %v769
        %v809 = vpop.f32.mrf.mxu0
        %v810 = vadd.f32 0.0, %v809
        %v811 = vpop.f32.mrf.mxu0
        %v812 = vpop.f32.mrf.mxu0
        %v813 = vadd.f32 0.0, %v812
        %v814 = vpop.f32.mrf.mxu0
        %815 = vdwg.mxu0
        %v816 = vpack.c.bf16 %v438, %v437
        %v817 = vld [vmem:[%s4] sm:$0xf]
        %v818 = vpack.c.bf16 %v813, %v810
        %v819 = vld [vmem:[%s5] sm:$0xf]
        %v821 = vsel %vm653, %v818, 0
        %v824 = vsel %vm771, %v819, 0
        %826 = vmatprep.subr.bf16.mxu0 0
        %827 = vmatpush1.bf16.msra.mxu0 0
        %828 = vmatprep.subr.bf16.mxu0 0
        %829 = vmatpush1.bf16.msra.mxu0 0
        %830 = vmatprep.subr.bf16.mxu0 0
        %831 = vmatpush1.bf16.msra.mxu0 0
        %832 = vmatprep.subr.bf16.mxu0 0
        %833 = vmatpush1.bf16.msra.mxu0 0
        %834 = vmatprep.subr.bf16.mxu0 0
        %835 = vmatpush1.bf16.msra.mxu0 0
        %836 = vmatprep.subr.bf16.mxu0 0
        %837 = vmatpush1.bf16.msra.mxu0 0
        %838 = vmatprep.subr.bf16.mxu0 0
        %839 = vmatpush1.bf16.msra.mxu0 0
        %840 = vmatprep.subr.bf16.mxu0 0
        %841 = vmatpush1.bf16.msra.mxu0 %v824
        %842 = vmatprep.subr.bf16.mxu0 0
        %843 = vmatpush2.bf16.msra.mxu0 0
        %844 = vmatprep.subr.bf16.mxu0 0
        %845 = vmatpush2.bf16.msra.mxu0 0
        %846 = vmatprep.subr.bf16.mxu0 0
        %847 = vmatpush2.bf16.msra.mxu0 0
        %848 = vmatprep.subr.bf16.mxu0 0
        %849 = vmatpush2.bf16.msra.mxu0 0
        %850 = vmatprep.subr.bf16.mxu0 0
        %851 = vmatpush2.bf16.msra.mxu0 0
        %852 = vmatprep.subr.bf16.mxu0 0
        %853 = vmatpush2.bf16.msra.mxu0 0
        %854 = vmatprep.subr.bf16.mxu0 0
        %855 = vmatpush2.bf16.msra.mxu0 0
        %856 = vmatprep.subr.bf16.mxu0 0
        %857 = vmatpush2.bf16.msra.mxu0 0
        %858 = vmatprep.mubr.bf16.mxu0 0
        %859 = vmatmul.mubr.bf16.gmra.mxu0 %v821
        %v860 = vpop.f32.mrf.mxu0
        %v861 = vadd.f32 0.0, %v860
        %v862 = vpop.f32.mrf.mxu0
        %v863 = vpop.f32.mrf.mxu0
        %v864 = vadd.f32 0.0, %v863
        %v865 = vpop.f32.mrf.mxu0
        %866 = vdwg.mxu0
        %v868 = vsel %vm653, %v816, 0
        %v871 = vsel %vm771, %v817, 0
        %873 = vmatprep.subr.bf16.mxu0 0
        %874 = vmatpush1.bf16.msra.mxu0 0
        %875 = vmatprep.subr.bf16.mxu0 0
        %876 = vmatpush1.bf16.msra.mxu0 0
        %877 = vmatprep.subr.bf16.mxu0 0
        %878 = vmatpush1.bf16.msra.mxu0 0
        %879 = vmatprep.subr.bf16.mxu0 0
        %880 = vmatpush1.bf16.msra.mxu0 0
        %881 = vmatprep.subr.bf16.mxu0 0
        %882 = vmatpush1.bf16.msra.mxu0 0
        %883 = vmatprep.subr.bf16.mxu0 0
        %884 = vmatpush1.bf16.msra.mxu0 0
        %885 = vmatprep.subr.bf16.mxu0 0
        %886 = vmatpush1.bf16.msra.mxu0 0
        %887 = vmatprep.subr.bf16.mxu0 0
        %888 = vmatpush1.bf16.msra.mxu0 %v871
        %889 = vmatprep.subr.bf16.mxu0 0
        %890 = vmatpush2.bf16.msra.mxu0 0
        %891 = vmatprep.subr.bf16.mxu0 0
        %892 = vmatpush2.bf16.msra.mxu0 0
        %893 = vmatprep.subr.bf16.mxu0 0
        %894 = vmatpush2.bf16.msra.mxu0 0
        %895 = vmatprep.subr.bf16.mxu0 0
        %896 = vmatpush2.bf16.msra.mxu0 0
        %897 = vmatprep.subr.bf16.mxu0 0
        %898 = vmatpush2.bf16.msra.mxu0 0
        %899 = vmatprep.subr.bf16.mxu0 0
        %900 = vmatpush2.bf16.msra.mxu0 0
        %901 = vmatprep.subr.bf16.mxu0 0
        %902 = vmatpush2.bf16.msra.mxu0 0
        %903 = vmatprep.subr.bf16.mxu0 0
        %904 = vmatpush2.bf16.msra.mxu0 0
        %905 = vmatprep.mubr.bf16.mxu0 0
        %906 = vmatmul.mubr.bf16.gmra.mxu0 %v868
        %v907 = vpop.f32.mrf.mxu0
        %v908 = vadd.f32 %v861, %v907
        %v909 = vpop.f32.mrf.mxu0
        %v910 = vpop.f32.mrf.mxu0
        %v911 = vadd.f32 %v864, %v910
        %v912 = vpop.f32.mrf.mxu0
        %913 = vdwg.mxu0
        %v914 = vld [vmem:[%s6] sm:$0x1]
        %v916 = vlaneseq
        %v917 = vshrl.u32 %v916, 7
        %v918 = vsub.s32 0, %v917
        %v919 = vrot.slane %v914, %v918
        %v921 = vadd.f32 %v908, %v919
        %v922 = vadd.f32 %v911, %v919
        %v923 = vmax.f32 %v921, 0.0
        %v924 = vmax.f32 %v922, 0.0
        %v925 = vpack.c.bf16 %v924, %v923
        %v926 = vld [vmem:[%s7] sm:$0xf]
        %v927 = vld [vmem:[%s7 + $0x4] sm:$0xf]
        %v928 = vld [vmem:[%s7 + $0x8] sm:$0xf]
        %v929 = vld [vmem:[%s7 + $0xc] sm:$0xf]
        %v930 = vld [vmem:[%s8] sm:$0x1]
        %v932 = vlaneseq
        %v933 = vshrl.u32 %v932, 7
        %v934 = vsub.s32 0, %v933
        %v935 = vrot.slane %v930, %v934
        %v941 = vunpack.c.l.b16 %v926
        %v942 = vunpack.c.l.b16 %v927
        %v943 = vunpack.c.l.b16 %v928
        %v944 = vunpack.c.l.b16 %v929
        %v945 = vpack.c.b16 %v942, %v941
        %v946 = vpack.c.b16 %v944, %v943
        %vm949 = vcmask 261120
        %v951 = vsel %vm949, %v925, 0
        %953 = vmatprep.subr.bf16.mxu0 0
        %954 = vmatpush1.bf16.msra.mxu0 0
        %955 = vmatprep.subr.bf16.mxu0 0
        %956 = vmatpush1.bf16.msra.mxu0 0
        %957 = vmatprep.subr.bf16.mxu0 0
        %958 = vmatpush1.bf16.msra.mxu0 0
        %959 = vmatprep.subr.bf16.mxu0 0
        %960 = vmatpush1.bf16.msra.mxu0 0
        %961 = vmatprep.subr.bf16.mxu0 0
        %962 = vmatpush1.bf16.msra.mxu0 0
        %963 = vmatprep.subr.bf16.mxu0 0
        %964 = vmatpush1.bf16.msra.mxu0 0
        %965 = vmatprep.subr.bf16.mxu0 0
        %966 = vmatpush1.bf16.msra.mxu0 %v946
        %967 = vmatprep.subr.bf16.mxu0 0
        %968 = vmatpush1.bf16.msra.mxu0 %v945
        %969 = vmatprep.subr.bf16.mxu0 0
        %970 = vmatpush2.bf16.msra.mxu0 0
        %971 = vmatprep.subr.bf16.mxu0 0
        %972 = vmatpush2.bf16.msra.mxu0 0
        %973 = vmatprep.subr.bf16.mxu0 0
        %974 = vmatpush2.bf16.msra.mxu0 0
        %975 = vmatprep.subr.bf16.mxu0 0
        %976 = vmatpush2.bf16.msra.mxu0 0
        %977 = vmatprep.subr.bf16.mxu0 0
        %978 = vmatpush2.bf16.msra.mxu0 0
        %979 = vmatprep.subr.bf16.mxu0 0
        %980 = vmatpush2.bf16.msra.mxu0 0
        %981 = vmatprep.subr.bf16.mxu0 0
        %982 = vmatpush2.bf16.msra.mxu0 0
        %983 = vmatprep.subr.bf16.mxu0 0
        %984 = vmatpush2.bf16.msra.mxu0 0
        %985 = vmatprep.mubr.bf16.mxu0 0
        %986 = vmatmul.mubr.bf16.gmra.mxu0 %v951
        %v987 = vpop.f32.mrf.mxu0
        %v988 = vadd.f32 %v935, %v987
        %v989 = vpop.f32.mrf.mxu0
        %v990 = vpop.f32.mrf.mxu0
        %v991 = vadd.f32 %v935, %v990
        %v992 = vpop.f32.mrf.mxu0
        %993 = vdwg.mxu0
        %v994 = vmax.f32 %v988, 0.0
        %v995 = vmax.f32 %v991, 0.0
        %v996 = vpack.c.bf16 %v995, %v994
        %v998 = vunpack.c.l.b16 %v996
        %v999 = vunpack.c.h.b16 %v996
        %v1000 = vpack.c.b16 %v998, %v998
        %v1001 = vpack.c.b16 %v999, %v999
        %1004 = vst [vmem:[%s402] sm:$0xf] %v1000
        %1005 = vst [vmem:[%s402 + $0x4] sm:$0xf] %v1001
        %s1006 = sand.u32 %s258, 1
        %s1007 = scalar_lea.sflag [#allocation3], %s1006
        %s1008 = sand.u32 %s258, 1
        %s1009 = smul.addr %s1008, 8
        %s1010 = scalar_lea.vmem [#allocation2], %s1009
        // Predicated region
        $region57: #{tpu_custom_call.1} parent=55 // pred_check
          %p1011 = pneg %p268
        $region58: #{tpu_custom_call.1} parent=55 // pred_check_branch
          %1013 = sbr.rel (%p1011) target = $region60
        $region59: #{tpu_custom_call.1} parent=55 // pred_region
          %s1014 = smul.u32 2, %s28
          %s1016 = ssub.s32 128, 128
          %1017 = vsyncadd %s1007, %s1016
          %s1018 = smul.addr %s27, 2
          %s1019 = sadd.s32 %s1014, %s1018
          %s1020 = smul.addr %s1019, 64
          %s1021 = scalar_lea.hbm %s9, %s1020
          %s1022 = sshll.u32 %s1010, 4
          %s1023 = int_to_ptr.vmem [resolvable:$true] %s1022
          %1028 = dma.vmem_to_hbm [thread:$0]  %s1023, 128, %s1021, %s1007, 64, 64, 4
        $region60: #{tpu_custom_call.1} parent=55 // pred_fallthru
          _
      $region56: #{tpu_custom_call.1} parent=5 // pred_fallthru
        _
      %p1029 = scmp.le.s32.totalorder 2, %s18
      // Predicated region
      $region61: #{tpu_custom_call.1} parent=5 // pred_check
        %p1030 = pneg %p1029
      $region62: #{tpu_custom_call.1} parent=5 // pred_check_branch
        %1032 = sbr.rel (%p1030) target = $region64
      $region63: #{tpu_custom_call.1} parent=5 // pred_region
        %s1033 = ssub.s32 %s18, 2
        // Predicated region
        $region65: #{tpu_custom_call.1} parent=63 // pred_check
          %p1034 = pneg %p274
        $region66: #{tpu_custom_call.1} parent=63 // pred_check_branch
          %1036 = sbr.rel (%p1034) target = $region68
        $region67: #{tpu_custom_call.1} parent=63 // pred_region
          %s1037 = sand.u32 %s259, 1
          %s1038 = scalar_lea.sflag [#allocation3], %s1037
          %s1039 = sand.u32 %s259, 1
          %s1040 = smul.addr %s1039, 8
          %s1041 = scalar_lea.vmem [#allocation2], %s1040
          %1042 = dma.done %s1038, 128
        $region68: #{tpu_custom_call.1} parent=63 // pred_fallthru
          _
      $region64: #{tpu_custom_call.1} parent=5 // pred_fallthru
        _
    $region6: #{tpu_custom_call.1} parent=1 // loop_footer
      %s22 = sadd.s32 1, %s18
    $region7: #{tpu_custom_call.1} parent=1 // loop_footer_branch
      %17 = sbr.rel target = $region3
    $region8: #{tpu_custom_call.1} parent=1 // loop_exit
      _
    %1043 = vsyncpa [#allocation3], 1
    %s1044 = scalar_lea.sflag [#allocation3], 1
    %1045 = vsyncpa %s1044, 1

// kernel: tpu_custom_call.1
$region0: #{tpu_custom_call.1}
  #allocation0 [shape = 'u32[]', space=smem, size = 0x4, offset = 0x4, fixed_abs, tag = 'smem constant byte address 0x4 - core index']
  #allocation1 [shape = 'u32[144,128]{1,0:T(1,128)}', space=vmem, size = 0x12000, scoped, tag = 'internal scratch']
  %s0 = inlined_call_operand.vmem [shape: f32[2,3,8], index: 0, kind: input, shape index: {}]
  %s1 = inlined_call_operand.vmem [shape: f32[2,16,3], index: 1, kind: input, shape index: {}]
  %s2 = inlined_call_operand.vmem [shape: f32[2,8,8], index: 2, kind: input, shape index: {}]
  %s3 = inlined_call_operand.vmem [shape: f32[2,16,8], index: 3, kind: input, shape index: {}]
  %s4 = inlined_call_operand.vmem [shape: bf16[8,32], index: 4, kind: input, shape index: {}]
  %s5 = inlined_call_operand.vmem [shape: bf16[8,32], index: 5, kind: input, shape index: {}]
  %s6 = inlined_call_operand.vmem [shape: f32[1,32], index: 6, kind: input, shape index: {}]
  %s7 = inlined_call_operand.vmem [shape: bf16[32,128], index: 7, kind: input, shape index: {}]
  %s8 = inlined_call_operand.vmem [shape: f32[1,128], index: 8, kind: input, shape index: {}]
  %s9 = inlined_call_operand.hbm [shape: bf16[2,16,128], index: 9, kind: output, shape index: {}]
  %s10 = sld [smem:[#allocation0]]
  $region69: #{tpu_custom_call.1} parent=0
    _
  %s12 = ssub.s32 1, %s10
  %s13 = scalar_select 0, %s12, %s10
  $region1: #{tpu_custom_call.1} parent=0
    #allocation2 [shape = 'u8[8192]{0}', space=vmem, size = 0x2000, scoped, tag = 'output window, operand 0']
    #allocation3 [shape = 's32[2]{0}', space=sflag, size = 0x8, scoped, tag = 'scoped memory for tpu_custom_call.1']
    %14 = vsyncpa [#allocation3], 0
    %s15 = scalar_lea.sflag [#allocation3], 1
    %16 = vsyncpa %s15, 0
    loop: start=0, step=1, limit=4
    $region2: #{tpu_custom_call.1} parent=1 // loop_pre_header
      _
    $region3: #{tpu_custom_call.1} parent=1 // loop_header
      %s18 = sphi 0, %s22
      %p19 = scmp.ge.s32.totalorder %s18, 4
      %s25 = sphi 0, %s37
      %s26 = sphi 0, %s33
      %s27 = sphi 0, %s25
      %s28 = sphi 0, %s26
      %s29 = sphi 0, %s27
      %s30 = sphi 0, %s28
      %s40 = sphi 0, %s42
      %s43 = sphi 0, %s40
      %s44 = sphi 0, %s43
      %s60 = sphi 0, %s44
      %s68 = sphi 0, %s70
      %s71 = sphi 0, %s68
      %s72 = sphi 0, %s71
      %s88 = sphi 0, %s72
      %s94 = sphi 0, %s96
      %s97 = sphi 0, %s94
      %s98 = sphi 0, %s97
      %s114 = sphi 0, %s98
      %s122 = sphi 0, %s124
      %s125 = sphi 0, %s122
      %s126 = sphi 0, %s125
      %s142 = sphi 0, %s126
      %s146 = sphi 0, %s146
      %s148 = sphi 0, %s146
      %s149 = sphi 0, %s148
      %s163 = sphi 0, %s149
      %s167 = sphi 0, %s167
      %s169 = sphi 0, %s167
      %s170 = sphi 0, %s169
      %s184 = sphi 0, %s170
      %s188 = sphi 0, %s188
      %s190 = sphi 0, %s188
      %s191 = sphi 0, %s190
      %s205 = sphi 0, %s191
      %s209 = sphi 0, %s209
      %s211 = sphi 0, %s209
      %s212 = sphi 0, %s211
      %s226 = sphi 0, %s212
      %s230 = sphi 0, %s230
      %s232 = sphi 0, %s230
      %s233 = sphi 0, %s232
      %s247 = sphi 0, %s233
      %s255 = sphi 0, %s257
      %s258 = sphi 0, %s255
      %s259 = sphi 0, %s258
      %s275 = sphi 0, %s259
    $region4: #{tpu_custom_call.1} parent=1 // loop_header_branch
      %21 = sbr.rel (%p19) target = $region8
    $region5: #{tpu_custom_call.1} parent=1 // loop_body
      %s23 = ssub.s32 %s18, 1
      %s24 = ssub.s32 %s18, 2
      %s31 = sadd.s32 1, %s26
      %p32 = scmp.ge.s32.totalorder %s31, 1
      %s33 = scalar_select %p32, 0, %s31
      %s34 = sadd.s32 1, %s25
      %s35 = scalar_select %p32, %s34, %s25
      %p36 = scmp.ge.s32.totalorder %s35, 2
      %s37 = scalar_select %p36, 0, %s35
      %s38 = ssub.s32 %s25, %s37
      %p39 = scmp.eq.s32.totalorder %s38, 0
      %s41 = sadd.s32 %s40, 1
      %s42 = scalar_select %p39, %s40, %s41
      %p45 = pneg %p39
      %p46 = scmp.eq.s32.totalorder %s18, 1
      %p47 = por %p45, %p46
      %p48 = scmp.ne.s32.totalorder %s40, %s43
      %p49 = scmp.eq.s32.totalorder %s18, 0
      %p50 = por %p48, %p49
      %p51 = scmp.ne.s32.totalorder %s40, %s43
      %p52 = scmp.eq.s32.totalorder %s23, 1
      %p53 = por %p51, %p52
      %p54 = scmp.ne.s32.totalorder %s43, %s44
      %p55 = scmp.eq.s32.totalorder %s23, 0
      %p56 = por %p54, %p55
      %p57 = scmp.ne.s32.totalorder %s43, %s44
      %p58 = scmp.eq.s32.totalorder %s24, 1
      %p59 = por %p57, %p58
      %p61 = scmp.ne.s32.totalorder %s44, %s60
      %p62 = scmp.eq.s32.totalorder %s24, 0
      %p63 = por %p61, %p62
      %s64 = ssub.s32 %s25, %s37
      %s65 = ssub.s32 %s26, %s33
      %s66 = sor.u32 %s64, %s65
      %p67 = scmp.eq.s32.totalorder %s66, 0
      %s69 = sadd.s32 %s68, 1
      %s70 = scalar_select %p67, %s68, %s69
      %p73 = pneg %p67
      %p74 = scmp.eq.s32.totalorder %s18, 1
      %p75 = por %p73, %p74
      %p76 = scmp.ne.s32.totalorder %s68, %s71
      %p77 = scmp.eq.s32.totalorder %s18, 0
      %p78 = por %p76, %p77
      %p79 = scmp.ne.s32.totalorder %s68, %s71
      %p80 = scmp.eq.s32.totalorder %s23, 1
      %p81 = por %p79, %p80
      %p82 = scmp.ne.s32.totalorder %s71, %s72
      %p83 = scmp.eq.s32.totalorder %s23, 0
      %p84 = por %p82, %p83
      %p85 = scmp.ne.s32.totalorder %s71, %s72
      %p86 = scmp.eq.s32.totalorder %s24, 1
      %p87 = por %p85, %p86
      %p89 = scmp.ne.s32.totalorder %s72, %s88
      %p90 = scmp.eq.s32.totalorder %s24, 0
      %p91 = por %p89, %p90
      %s92 = ssub.s32 %s25, %s37
      %p93 = scmp.eq.s32.totalorder %s92, 0
      %s95 = sadd.s32 %s94, 1
      %s96 = scalar_select %p93, %s94, %s95
      %p99 = pneg %p93
      %p100 = scmp.eq.s32.totalorder %s18, 1
      %p101 = por %p99, %p100
      %p102 = scmp.ne.s32.totalorder %s94, %s97
      %p103 = scmp.eq.s32.totalorder %s18, 0
      %p104 = por %p102, %p103
      %p105 = scmp.ne.s32.totalorder %s94, %s97
      %p106 = scmp.eq.s32.totalorder %s23, 1
      %p107 = por %p105, %p106
      %p108 = scmp.ne.s32.totalorder %s97, %s98
      %p109 = scmp.eq.s32.totalorder %s23, 0
      %p110 = por %p108, %p109
      %p111 = scmp.ne.s32.totalorder %s97, %s98
      %p112 = scmp.eq.s32.totalorder %s24, 1
      %p113 = por %p111, %p112
      %p115 = scmp.ne.s32.totalorder %s98, %s114
      %p116 = scmp.eq.s32.totalorder %s24, 0
      %p117 = por %p115, %p116
      %s118 = ssub.s32 %s25, %s37
      %s119 = ssub.s32 %s26, %s33
      %s120 = sor.u32 %s118, %s119
      %p121 = scmp.eq.s32.totalorder %s120, 0
      %s123 = sadd.s32 %s122, 1
      %s124 = scalar_select %p121, %s122, %s123
      %p127 = pneg %p121
      %p128 = scmp.eq.s32.totalorder %s18, 1
      %p129 = por %p127, %p128
      %p130 = scmp.ne.s32.totalorder %s122, %s125
      %p131 = scmp.eq.s32.totalorder %s18, 0
      %p132 = por %p130, %p131
      %p133 = scmp.ne.s32.totalorder %s122, %s125
      %p134 = scmp.eq.s32.totalorder %s23, 1
      %p135 = por %p133, %p134
      %p136 = scmp.ne.s32.totalorder %s125, %s126
      %p137 = scmp.eq.s32.totalorder %s23, 0
      %p138 = por %p136, %p137
      %p139 = scmp.ne.s32.totalorder %s125, %s126
      %p140 = scmp.eq.s32.totalorder %s24, 1
      %p141 = por %p139, %p140
      %p143 = scmp.ne.s32.totalorder %s126, %s142
      %p144 = scmp.eq.s32.totalorder %s24, 0
      %p145 = por %p143, %p144
      %s147 = sadd.s32 %s146, 1
      %p150 = scmp.eq.s32.totalorder %s18, 1
      %p151 = scmp.ne.s32.totalorder %s146, %s148
      %p152 = scmp.eq.s32.totalorder %s18, 0
      %p153 = por %p151, %p152
      %p154 = scmp.ne.s32.totalorder %s146, %s148
      %p155 = scmp.eq.s32.totalorder %s23, 1
      %p156 = por %p154, %p155
      %p157 = scmp.ne.s32.totalorder %s148, %s149
      %p158 = scmp.eq.s32.totalorder %s23, 0
      %p159 = por %p157, %p158
      %p160 = scmp.ne.s32.totalorder %s148, %s149
      %p161 = scmp.eq.s32.totalorder %s24, 1
      %p162 = por %p160, %p161
      %p164 = scmp.ne.s32.totalorder %s149, %s163
      %p165 = scmp.eq.s32.totalorder %s24, 0
      %p166 = por %p164, %p165
      %s168 = sadd.s32 %s167, 1
      %p171 = scmp.eq.s32.totalorder %s18, 1
      %p172 = scmp.ne.s32.totalorder %s167, %s169
      %p173 = scmp.eq.s32.totalorder %s18, 0
      %p174 = por %p172, %p173
      %p175 = scmp.ne.s32.totalorder %s167, %s169
      %p176 = scmp.eq.s32.totalorder %s23, 1
      %p177 = por %p175, %p176
      %p178 = scmp.ne.s32.totalorder %s169, %s170
      %p179 = scmp.eq.s32.totalorder %s23, 0
      %p180 = por %p178, %p179
      %p181 = scmp.ne.s32.totalorder %s169, %s170
      %p182 = scmp.eq.s32.totalorder %s24, 1
      %p183 = por %p181, %p182
      %p185 = scmp.ne.s32.totalorder %s170, %s184
      %p186 = scmp.eq.s32.totalorder %s24, 0
      %p187 = por %p185, %p186
      %s189 = sadd.s32 %s188, 1
      %p192 = scmp.eq.s32.totalorder %s18, 1
      %p193 = scmp.ne.s32.totalorder %s188, %s190
      %p194 = scmp.eq.s32.totalorder %s18, 0
      %p195 = por %p193, %p194
      %p196 = scmp.ne.s32.totalorder %s188, %s190
      %p197 = scmp.eq.s32.totalorder %s23, 1
      %p198 = por %p196, %p197
      %p199 = scmp.ne.s32.totalorder %s190, %s191
      %p200 = scmp.eq.s32.totalorder %s23, 0
      %p201 = por %p199, %p200
      %p202 = scmp.ne.s32.totalorder %s190, %s191
      %p203 = scmp.eq.s32.totalorder %s24, 1
      %p204 = por %p202, %p203
      %p206 = scmp.ne.s32.totalorder %s191, %s205
      %p207 = scmp.eq.s32.totalorder %s24, 0
      %p208 = por %p206, %p207
      %s210 = sadd.s32 %s209, 1
      %p213 = scmp.eq.s32.totalorder %s18, 1
      %p214 = scmp.ne.s32.totalorder %s209, %s211
      %p215 = scmp.eq.s32.totalorder %s18, 0
      %p216 = por %p214, %p215
      %p217 = scmp.ne.s32.totalorder %s209, %s211
      %p218 = scmp.eq.s32.totalorder %s23, 1
      %p219 = por %p217, %p218
      %p220 = scmp.ne.s32.totalorder %s211, %s212
      %p221 = scmp.eq.s32.totalorder %s23, 0
      %p222 = por %p220, %p221
      %p223 = scmp.ne.s32.totalorder %s211, %s212
      %p224 = scmp.eq.s32.totalorder %s24, 1
      %p225 = por %p223, %p224
      %p227 = scmp.ne.s32.totalorder %s212, %s226
      %p228 = scmp.eq.s32.totalorder %s24, 0
      %p229 = por %p227, %p228
      %s231 = sadd.s32 %s230, 1
      %p234 = scmp.eq.s32.totalorder %s18, 1
      %p235 = scmp.ne.s32.totalorder %s230, %s232
      %p236 = scmp.eq.s32.totalorder %s18, 0
      %p237 = por %p235, %p236
      %p238 = scmp.ne.s32.totalorder %s230, %s232
      %p239 = scmp.eq.s32.totalorder %s23, 1
      %p240 = por %p238, %p239
      %p241 = scmp.ne.s32.totalorder %s232, %s233
      %p242 = scmp.eq.s32.totalorder %s23, 0
      %p243 = por %p241, %p242
      %p244 = scmp.ne.s32.totalorder %s232, %s233
      %p245 = scmp.eq.s32.totalorder %s24, 1
      %p246 = por %p244, %p245
      %p248 = scmp.ne.s32.totalorder %s233, %s247
      %p249 = scmp.eq.s32.totalorder %s24, 0
      %p250 = por %p248, %p249
      %s251 = ssub.s32 %s25, %s37
      %s252 = ssub.s32 %s26, %s33
      %s253 = sor.u32 %s251, %s252
      %p254 = scmp.eq.s32.totalorder %s253, 0
      %s256 = sadd.s32 %s255, 1
      %s257 = scalar_select %p254, %s255, %s256
      %p260 = pneg %p254
      %p261 = scmp.eq.s32.totalorder %s18, 1
      %p262 = por %p260, %p261
      %p263 = scmp.ne.s32.totalorder %s255, %s258
      %p264 = scmp.eq.s32.totalorder %s18, 0
      %p265 = por %p263, %p264
      %p266 = scmp.ne.s32.totalorder %s255, %s258
      %p267 = scmp.eq.s32.totalorder %s23, 1
      %p268 = por %p266, %p267
      %p269 = scmp.ne.s32.totalorder %s258, %s259
      %p270 = scmp.eq.s32.totalorder %s23, 0
      %p271 = por %p269, %p270
      %p272 = scmp.ne.s32.totalorder %s258, %s259
      %p273 = scmp.eq.s32.totalorder %s24, 1
      %p274 = por %p272, %p273
      %p276 = scmp.ne.s32.totalorder %s259, %s275
      %p277 = scmp.eq.s32.totalorder %s24, 0
      %p278 = por %p276, %p277
      %p279 = scmp.le.s32.totalorder 1, %s18
      %p280 = scmp.lt.s32.totalorder %s18, 3
      %p281 = pnand %p279, %p280
      %p282 = pneg %p281
      // Predicated region
      $region9: #{tpu_custom_call.1} parent=5 // pred_check
        _
      $region10: #{tpu_custom_call.1} parent=5 // pred_check_branch
        %284 = sbr.rel (%p281) target = $region12
      $region11: #{tpu_custom_call.1} parent=5 // pred_region
        %s285 = ssub.s32 %s18, 1
        // Predicated region
        $region13: #{tpu_custom_call.1} parent=11 // pred_check
          %p286 = pneg %p159
        $region14: #{tpu_custom_call.1} parent=11 // pred_check_branch
          %288 = sbr.rel (%p286) target = $region16
        $region15: #{tpu_custom_call.1} parent=11 // pred_region
          _
        $region16: #{tpu_custom_call.1} parent=11 // pred_fallthru
          _
        // Predicated region
        $region17: #{tpu_custom_call.1} parent=11 // pred_check
          %p289 = pneg %p180
        $region18: #{tpu_custom_call.1} parent=11 // pred_check_branch
          %291 = sbr.rel (%p289) target = $region20
        $region19: #{tpu_custom_call.1} parent=11 // pred_region
          _
        $region20: #{tpu_custom_call.1} parent=11 // pred_fallthru
          _
        // Predicated region
        $region21: #{tpu_custom_call.1} parent=11 // pred_check
          %p292 = pneg %p201
        $region22: #{tpu_custom_call.1} parent=11 // pred_check_branch
          %294 = sbr.rel (%p292) target = $region24
        $region23: #{tpu_custom_call.1} parent=11 // pred_region
          _
        $region24: #{tpu_custom_call.1} parent=11 // pred_fallthru
          _
        // Predicated region
        $region25: #{tpu_custom_call.1} parent=11 // pred_check
          %p295 = pneg %p222
        $region26: #{tpu_custom_call.1} parent=11 // pred_check_branch
          %297 = sbr.rel (%p295) target = $region28
        $region27: #{tpu_custom_call.1} parent=11 // pred_region
          _
        $region28: #{tpu_custom_call.1} parent=11 // pred_fallthru
          _
        // Predicated region
        $region29: #{tpu_custom_call.1} parent=11 // pred_check
          %p298 = pneg %p243
        $region30: #{tpu_custom_call.1} parent=11 // pred_check_branch
          %300 = sbr.rel (%p298) target = $region32
        $region31: #{tpu_custom_call.1} parent=11 // pred_region
          _
        $region32: #{tpu_custom_call.1} parent=11 // pred_fallthru
          _
      $region12: #{tpu_custom_call.1} parent=5 // pred_fallthru
        _
      %p301 = scmp.lt.s32.totalorder %s18, 2
      // Predicated region
      $region33: #{tpu_custom_call.1} parent=5 // pred_check
        %p302 = pneg %p301
      $region34: #{tpu_custom_call.1} parent=5 // pred_check_branch
        %304 = sbr.rel (%p302) target = $region36
      $region35: #{tpu_custom_call.1} parent=5 // pred_region
        // Predicated region
        $region37: #{tpu_custom_call.1} parent=35 // pred_check
          %p305 = pneg %p50
        $region38: #{tpu_custom_call.1} parent=35 // pred_check_branch
          %307 = sbr.rel (%p305) target = $region40
        $region39: #{tpu_custom_call.1} parent=35 // pred_region
          %p308 = scmp.lt.s32.totalorder %s25, 1
          %s309 = scalar_select %p308, %s25, 1
          %s310 = smul.addr %s309, 4
          %s311 = scalar_lea.vmem %s0, %s310
        $region40: #{tpu_custom_call.1} parent=35 // pred_fallthru
          _
        // Predicated region
        $region41: #{tpu_custom_call.1} parent=35 // pred_check
          %p312 = pneg %p78
        $region42: #{tpu_custom_call.1} parent=35 // pred_check_branch
          %314 = sbr.rel (%p312) target = $region44
        $region43: #{tpu_custom_call.1} parent=35 // pred_region
          %s315 = smul.u32 2, %s26
          %p316 = scmp.lt.s32.totalorder %s25, 1
          %s317 = scalar_select %p316, %s25, 1
          %p318 = scmp.lt.s32.totalorder %s315, 1
          %s319 = scalar_select %p318, %s315, 1
          %s320 = smul.addr %s317, 2
          %s321 = sadd.s32 %s319, %s320
          %s322 = smul.addr %s321, 8
          %s323 = scalar_lea.vmem %s1, %s322
          %s324 = smul.u32 2, %s26
        $region44: #{tpu_custom_call.1} parent=35 // pred_fallthru
          _
        // Predicated region
        $region45: #{tpu_custom_call.1} parent=35 // pred_check
          %p325 = pneg %p104
        $region46: #{tpu_custom_call.1} parent=35 // pred_check_branch
          %327 = sbr.rel (%p325) target = $region48
        $region47: #{tpu_custom_call.1} parent=35 // pred_region
          %p328 = scmp.lt.s32.totalorder %s25, 1
          %s329 = scalar_select %p328, %s25, 1
          %s330 = smul.addr %s329, 8
          %s331 = scalar_lea.vmem %s2, %s330
        $region48: #{tpu_custom_call.1} parent=35 // pred_fallthru
          _
        // Predicated region
        $region49: #{tpu_custom_call.1} parent=35 // pred_check
          %p332 = pneg %p132
        $region50: #{tpu_custom_call.1} parent=35 // pred_check_branch
          %334 = sbr.rel (%p332) target = $region52
        $region51: #{tpu_custom_call.1} parent=35 // pred_region
          %s335 = smul.u32 2, %s26
          %p336 = scmp.lt.s32.totalorder %s25, 1
          %s337 = scalar_select %p336, %s25, 1
          %p338 = scmp.lt.s32.totalorder %s335, 1
          %s339 = scalar_select %p338, %s335, 1
          %s340 = smul.addr %s337, 2
          %s341 = sadd.s32 %s339, %s340
          %s342 = smul.addr %s341, 8
          %s343 = scalar_lea.vmem %s3, %s342
          %s344 = smul.u32 2, %s26
        $region52: #{tpu_custom_call.1} parent=35 // pred_fallthru
          _
      $region36: #{tpu_custom_call.1} parent=5 // pred_fallthru
        _
      %p345 = scmp.le.s32.totalorder 1, %s18
      %p346 = scmp.lt.s32.totalorder %s18, 3
      %p347 = pnand %p345, %p346
      %p348 = pneg %p347
      // Predicated region
      $region53: #{tpu_custom_call.1} parent=5 // pred_check
        _
      $region54: #{tpu_custom_call.1} parent=5 // pred_check_branch
        %350 = sbr.rel (%p347) target = $region56
      $region55: #{tpu_custom_call.1} parent=5 // pred_region
        %s351 = ssub.s32 %s18, 1
        %p352 = scmp.lt.s32.totalorder %s27, 1
        %s353 = scalar_select %p352, %s27, 1
        %s354 = smul.addr %s353, 4
        %s355 = scalar_lea.vmem %s0, %s354
        %p356 = pneg %p56
        %p357 = pneg %p53
        %s358 = smul.u32 2, %s28
        %p359 = scmp.lt.s32.totalorder %s27, 1
        %s360 = scalar_select %p359, %s27, 1
        %p361 = scmp.lt.s32.totalorder %s358, 1
        %s362 = scalar_select %p361, %s358, 1
        %s363 = smul.addr %s360, 2
        %s364 = sadd.s32 %s362, %s363
        %s365 = smul.addr %s364, 8
        %s366 = scalar_lea.vmem %s1, %s365
        %p367 = pneg %p84
        %p368 = pneg %p81
        %p369 = scmp.lt.s32.totalorder %s27, 1
        %s370 = scalar_select %p369, %s27, 1
        %s371 = smul.addr %s370, 8
        %s372 = scalar_lea.vmem %s2, %s371
        %p373 = pneg %p110
        %p374 = pneg %p107
        %s375 = smul.u32 2, %s28
        %p376 = scmp.lt.s32.totalorder %s27, 1
        %s377 = scalar_select %p376, %s27, 1
        %p378 = scmp.lt.s32.totalorder %s375, 1
        %s379 = scalar_select %p378, %s375, 1
        %s380 = smul.addr %s377, 2
        %s381 = sadd.s32 %s379, %s380
        %s382 = smul.addr %s381, 8
        %s383 = scalar_lea.vmem %s3, %s382
        %p384 = pneg %p138
        %p385 = pneg %p135
        %p386 = pneg %p159
        %p387 = pneg %p156
        %p388 = pneg %p180
        %p389 = pneg %p177
        %p390 = pneg %p201
        %p391 = pneg %p198
        %p392 = pneg %p222
        %p393 = pneg %p219
        %p394 = pneg %p243
        %p395 = pneg %p240
        %p396 = pneg %p271
        %p397 = pneg %p268
        %s398 = sand.u32 %s258, 1
        %s399 = scalar_lea.sflag [#allocation3], %s398
        %s400 = sand.u32 %s258, 1
        %s401 = smul.addr %s400, 8
        %s402 = scalar_lea.vmem [#allocation2], %s401
        %p403 = scmp.lt.s32.totalorder %s27, 1
        %s404 = scalar_select %p403, %s27, 1
        %s405 = smul.addr %s404, 4
        %s406 = scalar_lea.vmem %s0, %s405
        %s407 = smul.u32 2, %s28
        %p408 = scmp.lt.s32.totalorder %s27, 1
        %s409 = scalar_select %p408, %s27, 1
        %p410 = scmp.lt.s32.totalorder %s407, 1
        %s411 = scalar_select %p410, %s407, 1
        %s412 = smul.addr %s409, 2
        %s413 = sadd.s32 %s411, %s412
        %s414 = smul.addr %s413, 8
        %s415 = scalar_lea.vmem %s1, %s414
        %s416 = smul.u32 2, %s28
        %p417 = scmp.lt.s32.totalorder %s27, 1
        %s418 = scalar_select %p417, %s27, 1
        %s419 = smul.addr %s418, 8
        %s420 = scalar_lea.vmem %s2, %s419
        %s421 = smul.u32 2, %s28
        %p422 = scmp.lt.s32.totalorder %s27, 1
        %s423 = scalar_select %p422, %s27, 1
        %p424 = scmp.lt.s32.totalorder %s421, 1
        %s425 = scalar_select %p424, %s421, 1
        %s426 = smul.addr %s423, 2
        %s427 = sadd.s32 %s425, %s426
        %s428 = smul.addr %s427, 8
        %s429 = scalar_lea.vmem %s3, %s428
        %s430 = smul.u32 2, %s28
        %s431 = smul.u32 2, %s28
        %v433 = vld [vmem:[%s406] sm:$0x7]
        %v434 = vld [vmem:[%s415] sm:$0xff]
        %v435 = vld [vmem:[%s415 + $0x8] sm:$0xff]
        %v436 = vld [vmem:[%s420] sm:$0xff]
        %v437 = vld [vmem:[%s429] sm:$0xff]
        %v438 = vld [vmem:[%s429 + $0x8] sm:$0xff]
        %v439 = vpack.c.bf16 %v435, %v434
        %v440 = vunpack.c.l.bf16 %v439
        %v441 = vunpack.c.h.bf16 %v439
        %v442 = vsub.f32 %v434, %v440
        %v443 = vsub.f32 %v435, %v441
        %v444 = vpack.c.bf16 %v443, %v442
        %v445 = vpack.c.bf16 %v433, %v433
        %v446 = vunpack.c.l.bf16 %v445
        %v447 = vsub.f32 %v433, %v446
        %v448 = vpack.c.bf16 %v447, %v447
        %vm449 = vcmask 23552
        %v451 = vsel %vm449, %v444, 0
        %vm453 = vcmask 1040384
        %vm454 = vcmask 1041408
        %v455 = vsel %vm453, 4294967295, 65535
        %v456 = vsel %vm454, %v455, 0
        %v458 = vand.u32 %v445, %v456
        %460 = vmatprep.subr.bf16.mxu0 0
        %461 = vmatpush1.bf16.msra.mxu0 0
        %462 = vmatprep.subr.bf16.mxu0 0
        %463 = vmatpush1.bf16.msra.mxu0 0
        %464 = vmatprep.subr.bf16.mxu0 0
        %465 = vmatpush1.bf16.msra.mxu0 0
        %466 = vmatprep.subr.bf16.mxu0 0
        %467 = vmatpush1.bf16.msra.mxu0 0
        %468 = vmatprep.subr.bf16.mxu0 0
        %469 = vmatpush1.bf16.msra.mxu0 0
        %470 = vmatprep.subr.bf16.mxu0 0
        %471 = vmatpush1.bf16.msra.mxu0 0
        %472 = vmatprep.subr.bf16.mxu0 0
        %473 = vmatpush1.bf16.msra.mxu0 0
        %474 = vmatprep.subr.bf16.mxu0 0
        %475 = vmatpush1.bf16.msra.mxu0 %v458
        %476 = vmatprep.subr.bf16.mxu0 0
        %477 = vmatpush2.bf16.msra.mxu0 0
        %478 = vmatprep.subr.bf16.mxu0 0
        %479 = vmatpush2.bf16.msra.mxu0 0
        %480 = vmatprep.subr.bf16.mxu0 0
        %481 = vmatpush2.bf16.msra.mxu0 0
        %482 = vmatprep.subr.bf16.mxu0 0
        %483 = vmatpush2.bf16.msra.mxu0 0
        %484 = vmatprep.subr.bf16.mxu0 0
        %485 = vmatpush2.bf16.msra.mxu0 0
        %486 = vmatprep.subr.bf16.mxu0 0
        %487 = vmatpush2.bf16.msra.mxu0 0
        %488 = vmatprep.subr.bf16.mxu0 0
        %489 = vmatpush2.bf16.msra.mxu0 0
        %490 = vmatprep.subr.bf16.mxu0 0
        %491 = vmatpush2.bf16.msra.mxu0 0
        %492 = vmatprep.mubr.bf16.mxu0 0
        %493 = vmatmul.mubr.bf16.gmra.mxu0 %v451
        %v494 = vpop.f32.mrf.mxu0
        %v495 = vadd.f32 0.0, %v494
        %v496 = vpop.f32.mrf.mxu0
        %v497 = vpop.f32.mrf.mxu0
        %v498 = vadd.f32 0.0, %v497
        %v499 = vpop.f32.mrf.mxu0
        %500 = vdwg.mxu0
        %v502 = vsel %vm449, %v439, 0
        %504 = vmatprep.subr.bf16.mxu0 0
        %505 = vmatpush1.bf16.msra.mxu0 0
        %506 = vmatprep.subr.bf16.mxu0 0
        %507 = vmatpush1.bf16.msra.mxu0 0
        %508 = vmatprep.subr.bf16.mxu0 0
        %509 = vmatpush1.bf16.msra.mxu0 0
        %510 = vmatprep.subr.bf16.mxu0 0
        %511 = vmatpush1.bf16.msra.mxu0 0
        %512 = vmatprep.subr.bf16.mxu0 0
        %513 = vmatpush1.bf16.msra.mxu0 0
        %514 = vmatprep.subr.bf16.mxu0 0
        %515 = vmatpush1.bf16.msra.mxu0 0
        %516 = vmatprep.subr.bf16.mxu0 0
        %517 = vmatpush1.bf16.msra.mxu0 0
        %518 = vmatprep.subr.bf16.mxu0 0
        %519 = vmatpush1.bf16.msra.mxu0 %v458
        %520 = vmatprep.subr.bf16.mxu0 0
        %521 = vmatpush2.bf16.msra.mxu0 0
        %522 = vmatprep.subr.bf16.mxu0 0
        %523 = vmatpush2.bf16.msra.mxu0 0
        %524 = vmatprep.subr.bf16.mxu0 0
        %525 = vmatpush2.bf16.msra.mxu0 0
        %526 = vmatprep.subr.bf16.mxu0 0
        %527 = vmatpush2.bf16.msra.mxu0 0
        %528 = vmatprep.subr.bf16.mxu0 0
        %529 = vmatpush2.bf16.msra.mxu0 0
        %530 = vmatprep.subr.bf16.mxu0 0
        %531 = vmatpush2.bf16.msra.mxu0 0
        %532 = vmatprep.subr.bf16.mxu0 0
        %533 = vmatpush2.bf16.msra.mxu0 0
        %534 = vmatprep.subr.bf16.mxu0 0
        %535 = vmatpush2.bf16.msra.mxu0 0
        %536 = vmatprep.mubr.bf16.mxu0 0
        %537 = vmatmul.mubr.bf16.gmra.mxu0 %v502
        %v538 = vpop.f32.mrf.mxu0
        %v539 = vadd.f32 %v495, %v538
        %v540 = vpop.f32.mrf.mxu0
        %v541 = vpop.f32.mrf.mxu0
        %v542 = vadd.f32 %v498, %v541
        %v543 = vpop.f32.mrf.mxu0
        %544 = vdwg.mxu0
        %v546 = vand.u32 %v448, %v456
        %548 = vmatprep.subr.bf16.mxu0 0
        %549 = vmatpush1.bf16.msra.mxu0 0
        %550 = vmatprep.subr.bf16.mxu0 0
        %551 = vmatpush1.bf16.msra.mxu0 0
        %552 = vmatprep.subr.bf16.mxu0 0
        %553 = vmatpush1.bf16.msra.mxu0 0
        %554 = vmatprep.subr.bf16.mxu0 0
        %555 = vmatpush1.bf16.msra.mxu0 0
        %556 = vmatprep.subr.bf16.mxu0 0
        %557 = vmatpush1.bf16.msra.mxu0 0
        %558 = vmatprep.subr.bf16.mxu0 0
        %559 = vmatpush1.bf16.msra.mxu0 0
        %560 = vmatprep.subr.bf16.mxu0 0
        %561 = vmatpush1.bf16.msra.mxu0 0
        %562 = vmatprep.subr.bf16.mxu0 0
        %563 = vmatpush1.bf16.msra.mxu0 %v546
        %564 = vmatprep.subr.bf16.mxu0 0
        %565 = vmatpush2.bf16.msra.mxu0 0
        %566 = vmatprep.subr.bf16.mxu0 0
        %567 = vmatpush2.bf16.msra.mxu0 0
        %568 = vmatprep.subr.bf16.mxu0 0
        %569 = vmatpush2.bf16.msra.mxu0 0
        %570 = vmatprep.subr.bf16.mxu0 0
        %571 = vmatpush2.bf16.msra.mxu0 0
        %572 = vmatprep.subr.bf16.mxu0 0
        %573 = vmatpush2.bf16.msra.mxu0 0
        %574 = vmatprep.subr.bf16.mxu0 0
        %575 = vmatpush2.bf16.msra.mxu0 0
        %576 = vmatprep.subr.bf16.mxu0 0
        %577 = vmatpush2.bf16.msra.mxu0 0
        %578 = vmatprep.subr.bf16.mxu0 0
        %579 = vmatpush2.bf16.msra.mxu0 0
        %580 = vmatprep.mubr.bf16.mxu0 0
        %581 = vmatmul.mubr.bf16.gmra.mxu0 %v502
        %v582 = vpop.f32.mrf.mxu0
        %v583 = vadd.f32 0.0, %v582
        %v584 = vpop.f32.mrf.mxu0
        %v585 = vpop.f32.mrf.mxu0
        %v586 = vadd.f32 0.0, %v585
        %v587 = vpop.f32.mrf.mxu0
        %588 = vdwg.mxu0
        %v589 = vadd.f32 %v539, %v583
        %v590 = vadd.f32 %v542, %v586
        %v591 = vmul.f32 %v434, %v434
        %v592 = vmul.f32 %v435, %v435
        %595 = vrot.lane.b32.xlu0 %v591, 127
        %v596 = vpop.permute.xlu0 %595
        %597 = vrot.lane.b32.xlu0 %v592, 127
        %v598 = vpop.permute.xlu0 %597
        %v601 = vadd.f32 %v591, %v596
        %v602 = vadd.f32 %v592, %v598
        %603 = vrot.lane.b32.xlu0 %v591, 126
        %v604 = vpop.permute.xlu0 %603
        %605 = vrot.lane.b32.xlu0 %v592, 126
        %v606 = vpop.permute.xlu0 %605
        %v609 = vadd.f32 %v601, %v604
        %v610 = vadd.f32 %v602, %v606
        %v611 = vmul.f32 %v433, %v433
        %v613 = vrot.slane %v611, 1
        %v615 = vadd.f32 %v611, %v613
        %v616 = vrot.slane %v611, 2
        %v618 = vadd.f32 %v615, %v616
        %620 = vset.pattern.permute.xlu0 0
        %621 = vperm.xlu0 %620, %v609
        %v622 = vpop.permute.xlu0 %621
        %625 = vset.pattern.permute.xlu0 0
        %626 = vperm.xlu0 %625, %v610
        %v627 = vpop.permute.xlu0 %626
        %v629 = vlaneseq
        %v630 = vshrl.u32 %v629, 7
        %v631 = vsub.s32 0, %v630
        %v632 = vrot.slane %v618, %v631
        %v633 = vadd.f32 %v622, %v632
        %v634 = vadd.f32 %v627, %v632
        %v635 = vmul.f32 %v589, 2.0
        %v636 = vmul.f32 %v590, 2.0
        %v637 = vsub.f32 %v633, %v635
        %v638 = vsub.f32 %v634, %v636
        %v639 = vmax.f32 %v637, 0.0
        %v640 = vmax.f32 %v638, 0.0
        %v641 = vadd.f32 %v639, 1e-08
        %v642 = vadd.f32 %v640, 1e-08
        %v643 = vrcp.pop %v641
        %v644 = vrcp.pop %v642
        %v645 = vlaneseq
        %v646 = vand.u32 %v645, 127
        %v649 = vand.u32 %v639, 4294967288
        %v650 = vand.u32 %v640, 4294967288
        %v651 = vor.u32 %v649, %v646
        %v652 = vor.u32 %v650, %v646
        %vm653 = vcmask 64512
        %v654 = vsel %vm653, %v651, 2147483647
        %v655 = vand.u32 %v654, 65535
        %v656 = vshra.s32 %v654, 16
        %v657 = vcvt.s32.f32 %v655
        %v658 = vcvt.s32.f32 %v656
        %659 = vmin.xlane.f32.xlu0 %v658
        %v660 = vpop.xlane.xlu0 %659
        %vm661 = vcmp.eq.f32.partialorder %v658, %v660
        %v662 = vsel %vm661, %v657, inf
        %663 = vmin.xlane.f32.xlu0 %v662
        %v664 = vpop.xlane.xlu0 %663
        %v665 = vcvt.f32.s32 %v664
        %v666 = vcvt.f32.s32 %v660
        %v667 = vshll.u32 %v666, 16
        %v668 = vadd.s32 %v667, %v665
        %v669 = vsel %vm653, %v652, 2147483647
        %v670 = vand.u32 %v669, 65535
        %v671 = vshra.s32 %v669, 16
        %v672 = vcvt.s32.f32 %v670
        %v673 = vcvt.s32.f32 %v671
        %674 = vmin.xlane.f32.xlu0 %v673
        %v675 = vpop.xlane.xlu0 %674
        %vm676 = vcmp.eq.f32.partialorder %v673, %v675
        %v677 = vsel %vm676, %v672, inf
        %678 = vmin.xlane.f32.xlu0 %v677
        %v679 = vpop.xlane.xlu0 %678
        %v680 = vcvt.f32.s32 %v679
        %v681 = vcvt.f32.s32 %v675
        %v682 = vshll.u32 %v681, 16
        %v683 = vadd.s32 %v682, %v680
        %vm684 = vcmp.eq.s32.totalorder %v651, %v668
        %vm685 = vcmp.eq.s32.totalorder %v652, %v683
        %v686 = vsel %vm684, 2147483647, %v651
        %v687 = vsel %vm685, 2147483647, %v652
        %v688 = vsel %vm653, %v686, 2147483647
        %v689 = vand.u32 %v688, 65535
        %v690 = vshra.s32 %v688, 16
        %v691 = vcvt.s32.f32 %v689
        %v692 = vcvt.s32.f32 %v690
        %693 = vmin.xlane.f32.xlu0 %v692
        %v694 = vpop.xlane.xlu0 %693
        %vm695 = vcmp.eq.f32.partialorder %v692, %v694
        %v696 = vsel %vm695, %v691, inf
        %697 = vmin.xlane.f32.xlu0 %v696
        %v698 = vpop.xlane.xlu0 %697
        %v699 = vcvt.f32.s32 %v698
        %v700 = vcvt.f32.s32 %v694
        %v701 = vshll.u32 %v700, 16
        %v702 = vadd.s32 %v701, %v699
        %v703 = vsel %vm653, %v687, 2147483647
        %v704 = vand.u32 %v703, 65535
        %v705 = vshra.s32 %v703, 16
        %v706 = vcvt.s32.f32 %v704
        %v707 = vcvt.s32.f32 %v705
        %708 = vmin.xlane.f32.xlu0 %v707
        %v709 = vpop.xlane.xlu0 %708
        %vm710 = vcmp.eq.f32.partialorder %v707, %v709
        %v711 = vsel %vm710, %v706, inf
        %712 = vmin.xlane.f32.xlu0 %v711
        %v713 = vpop.xlane.xlu0 %712
        %v714 = vcvt.f32.s32 %v713
        %v715 = vcvt.f32.s32 %v709
        %v716 = vshll.u32 %v715, 16
        %v717 = vadd.s32 %v716, %v714
        %vm718 = vcmp.eq.s32.totalorder %v686, %v702
        %vm719 = vcmp.eq.s32.totalorder %v687, %v717
        %v720 = vsel %vm718, 2147483647, %v686
        %v721 = vsel %vm719, 2147483647, %v687
        %v722 = vsel %vm653, %v720, 2147483647
        %v723 = vand.u32 %v722, 65535
        %v724 = vshra.s32 %v722, 16
        %v725 = vcvt.s32.f32 %v723
        %v726 = vcvt.s32.f32 %v724
        %727 = vmin.xlane.f32.xlu0 %v726
        %v728 = vpop.xlane.xlu0 %727
        %vm729 = vcmp.eq.f32.partialorder %v726, %v728
        %v730 = vsel %vm729, %v725, inf
        %731 = vmin.xlane.f32.xlu0 %v730
        %v732 = vpop.xlane.xlu0 %731
        %v733 = vcvt.f32.s32 %v732
        %v734 = vcvt.f32.s32 %v728
        %v735 = vshll.u32 %v734, 16
        %v736 = vadd.s32 %v735, %v733
        %v737 = vsel %vm653, %v721, 2147483647
        %v738 = vand.u32 %v737, 65535
        %v739 = vshra.s32 %v737, 16
        %v740 = vcvt.s32.f32 %v738
        %v741 = vcvt.s32.f32 %v739
        %742 = vmin.xlane.f32.xlu0 %v741
        %v743 = vpop.xlane.xlu0 %742
        %vm744 = vcmp.eq.f32.partialorder %v741, %v743
        %v745 = vsel %vm744, %v740, inf
        %746 = vmin.xlane.f32.xlu0 %v745
        %v747 = vpop.xlane.xlu0 %746
        %v748 = vcvt.f32.s32 %v747
        %v749 = vcvt.f32.s32 %v743
        %v750 = vshll.u32 %v749, 16
        %v751 = vadd.s32 %v750, %v748
        %vm752 = vcmp.le.s32.totalorder %v651, %v736
        %vm753 = vcmp.le.s32.totalorder %v652, %v751
        %v754 = vsel %vm752, %v643, 0.0
        %v755 = vsel %vm753, %v644, 0.0
        %v756 = vsel %vm653, %v754, 0.0
        %757 = vadd.xlane.f32.xlu0 %v756
        %v758 = vpop.xlane.xlu0 %757
        %v759 = vsel %vm653, %v755, 0.0
        %760 = vadd.xlane.f32.xlu0 %v759
        %v761 = vpop.xlane.xlu0 %760
        %v762 = vrcp.pop %v758
        %v763 = vrcp.pop %v761
        %v764 = vmul.f32 %v754, %v762
        %v765 = vmul.f32 %v755, %v763
        %v766 = vpack.c.bf16 %v765, %v764
        %v767 = vpack.c.bf16 %v436, %v436
        %v769 = vsel %vm653, %v766, 0
        %vm771 = vcmask 1043456
        %v773 = vsel %vm771, %v767, 0
        %775 = vmatprep.subr.bf16.mxu0 0
        %776 = vmatpush1.bf16.msra.mxu0 0
        %777 = vmatprep.subr.bf16.mxu0 0
        %778 = vmatpush1.bf16.msra.mxu0 0
        %779 = vmatprep.subr.bf16.mxu0 0
        %780 = vmatpush1.bf16.msra.mxu0 0
        %781 = vmatprep.subr.bf16.mxu0 0
        %782 = vmatpush1.bf16.msra.mxu0 0
        %783 = vmatprep.subr.bf16.mxu0 0
        %784 = vmatpush1.bf16.msra.mxu0 0
        %785 = vmatprep.subr.bf16.mxu0 0
        %786 = vmatpush1.bf16.msra.mxu0 0
        %787 = vmatprep.subr.bf16.mxu0 0
        %788 = vmatpush1.bf16.msra.mxu0 0
        %789 = vmatprep.subr.bf16.mxu0 0
        %790 = vmatpush1.bf16.msra.mxu0 %v773
        %791 = vmatprep.subr.bf16.mxu0 0
        %792 = vmatpush2.bf16.msra.mxu0 0
        %793 = vmatprep.subr.bf16.mxu0 0
        %794 = vmatpush2.bf16.msra.mxu0 0
        %795 = vmatprep.subr.bf16.mxu0 0
        %796 = vmatpush2.bf16.msra.mxu0 0
        %797 = vmatprep.subr.bf16.mxu0 0
        %798 = vmatpush2.bf16.msra.mxu0 0
        %799 = vmatprep.subr.bf16.mxu0 0
        %800 = vmatpush2.bf16.msra.mxu0 0
        %801 = vmatprep.subr.bf16.mxu0 0
        %802 = vmatpush2.bf16.msra.mxu0 0
        %803 = vmatprep.subr.bf16.mxu0 0
        %804 = vmatpush2.bf16.msra.mxu0 0
        %805 = vmatprep.subr.bf16.mxu0 0
        %806 = vmatpush2.bf16.msra.mxu0 0
        %807 = vmatprep.mubr.bf16.mxu0 0
        %808 = vmatmul.mubr.bf16.gmra.mxu0 %v769
        %v809 = vpop.f32.mrf.mxu0
        %v810 = vadd.f32 0.0, %v809
        %v811 = vpop.f32.mrf.mxu0
        %v812 = vpop.f32.mrf.mxu0
        %v813 = vadd.f32 0.0, %v812
        %v814 = vpop.f32.mrf.mxu0
        %815 = vdwg.mxu0
        %v816 = vpack.c.bf16 %v438, %v437
        %v817 = vld [vmem:[%s4] sm:$0xf]
        %v818 = vpack.c.bf16 %v813, %v810
        %v819 = vld [vmem:[%s5] sm:$0xf]
        %v821 = vsel %vm653, %v818, 0
        %v824 = vsel %vm771, %v819, 0
        %826 = vmatprep.subr.bf16.mxu0 0
        %827 = vmatpush1.bf16.msra.mxu0 0
        %828 = vmatprep.subr.bf16.mxu0 0
        %829 = vmatpush1.bf16.msra.mxu0 0
        %830 = vmatprep.subr.bf16.mxu0 0
        %831 = vmatpush1.bf16.msra.mxu0 0
        %832 = vmatprep.subr.bf16.mxu0 0
        %833 = vmatpush1.bf16.msra.mxu0 0
        %834 = vmatprep.subr.bf16.mxu0 0
        %835 = vmatpush1.bf16.msra.mxu0 0
        %836 = vmatprep.subr.bf16.mxu0 0
        %837 = vmatpush1.bf16.msra.mxu0 0
        %838 = vmatprep.subr.bf16.mxu0 0
        %839 = vmatpush1.bf16.msra.mxu0 0
        %840 = vmatprep.subr.bf16.mxu0 0
        %841 = vmatpush1.bf16.msra.mxu0 %v824
        %842 = vmatprep.subr.bf16.mxu0 0
        %843 = vmatpush2.bf16.msra.mxu0 0
        %844 = vmatprep.subr.bf16.mxu0 0
        %845 = vmatpush2.bf16.msra.mxu0 0
        %846 = vmatprep.subr.bf16.mxu0 0
        %847 = vmatpush2.bf16.msra.mxu0 0
        %848 = vmatprep.subr.bf16.mxu0 0
        %849 = vmatpush2.bf16.msra.mxu0 0
        %850 = vmatprep.subr.bf16.mxu0 0
        %851 = vmatpush2.bf16.msra.mxu0 0
        %852 = vmatprep.subr.bf16.mxu0 0
        %853 = vmatpush2.bf16.msra.mxu0 0
        %854 = vmatprep.subr.bf16.mxu0 0
        %855 = vmatpush2.bf16.msra.mxu0 0
        %856 = vmatprep.subr.bf16.mxu0 0
        %857 = vmatpush2.bf16.msra.mxu0 0
        %858 = vmatprep.mubr.bf16.mxu0 0
        %859 = vmatmul.mubr.bf16.gmra.mxu0 %v821
        %v860 = vpop.f32.mrf.mxu0
        %v861 = vadd.f32 0.0, %v860
        %v862 = vpop.f32.mrf.mxu0
        %v863 = vpop.f32.mrf.mxu0
        %v864 = vadd.f32 0.0, %v863
        %v865 = vpop.f32.mrf.mxu0
        %866 = vdwg.mxu0
        %v868 = vsel %vm653, %v816, 0
        %v871 = vsel %vm771, %v817, 0
        %873 = vmatprep.subr.bf16.mxu0 0
        %874 = vmatpush1.bf16.msra.mxu0 0
        %875 = vmatprep.subr.bf16.mxu0 0
        %876 = vmatpush1.bf16.msra.mxu0 0
        %877 = vmatprep.subr.bf16.mxu0 0
        %878 = vmatpush1.bf16.msra.mxu0 0
        %879 = vmatprep.subr.bf16.mxu0 0
        %880 = vmatpush1.bf16.msra.mxu0 0
        %881 = vmatprep.subr.bf16.mxu0 0
        %882 = vmatpush1.bf16.msra.mxu0 0
        %883 = vmatprep.subr.bf16.mxu0 0
        %884 = vmatpush1.bf16.msra.mxu0 0
        %885 = vmatprep.subr.bf16.mxu0 0
        %886 = vmatpush1.bf16.msra.mxu0 0
        %887 = vmatprep.subr.bf16.mxu0 0
        %888 = vmatpush1.bf16.msra.mxu0 %v871
        %889 = vmatprep.subr.bf16.mxu0 0
        %890 = vmatpush2.bf16.msra.mxu0 0
        %891 = vmatprep.subr.bf16.mxu0 0
        %892 = vmatpush2.bf16.msra.mxu0 0
        %893 = vmatprep.subr.bf16.mxu0 0
        %894 = vmatpush2.bf16.msra.mxu0 0
        %895 = vmatprep.subr.bf16.mxu0 0
        %896 = vmatpush2.bf16.msra.mxu0 0
        %897 = vmatprep.subr.bf16.mxu0 0
        %898 = vmatpush2.bf16.msra.mxu0 0
        %899 = vmatprep.subr.bf16.mxu0 0
        %900 = vmatpush2.bf16.msra.mxu0 0
        %901 = vmatprep.subr.bf16.mxu0 0
        %902 = vmatpush2.bf16.msra.mxu0 0
        %903 = vmatprep.subr.bf16.mxu0 0
        %904 = vmatpush2.bf16.msra.mxu0 0
        %905 = vmatprep.mubr.bf16.mxu0 0
        %906 = vmatmul.mubr.bf16.gmra.mxu0 %v868
        %v907 = vpop.f32.mrf.mxu0
        %v908 = vadd.f32 %v861, %v907
        %v909 = vpop.f32.mrf.mxu0
        %v910 = vpop.f32.mrf.mxu0
        %v911 = vadd.f32 %v864, %v910
        %v912 = vpop.f32.mrf.mxu0
        %913 = vdwg.mxu0
        %v914 = vld [vmem:[%s6] sm:$0x1]
        %v916 = vlaneseq
        %v917 = vshrl.u32 %v916, 7
        %v918 = vsub.s32 0, %v917
        %v919 = vrot.slane %v914, %v918
        %v921 = vadd.f32 %v908, %v919
        %v922 = vadd.f32 %v911, %v919
        %v923 = vmax.f32 %v921, 0.0
        %v924 = vmax.f32 %v922, 0.0
        %v925 = vpack.c.bf16 %v924, %v923
        %v926 = vld [vmem:[%s7] sm:$0xf]
        %v927 = vld [vmem:[%s7 + $0x4] sm:$0xf]
        %v928 = vld [vmem:[%s7 + $0x8] sm:$0xf]
        %v929 = vld [vmem:[%s7 + $0xc] sm:$0xf]
        %v930 = vld [vmem:[%s8] sm:$0x1]
        %v932 = vlaneseq
        %v933 = vshrl.u32 %v932, 7
        %v934 = vsub.s32 0, %v933
        %v935 = vrot.slane %v930, %v934
        %v941 = vunpack.c.l.b16 %v926
        %v942 = vunpack.c.l.b16 %v927
        %v943 = vunpack.c.l.b16 %v928
        %v944 = vunpack.c.l.b16 %v929
        %v945 = vpack.c.b16 %v942, %v941
        %v946 = vpack.c.b16 %v944, %v943
        %vm949 = vcmask 261120
        %v951 = vsel %vm949, %v925, 0
        %953 = vmatprep.subr.bf16.mxu0 0
        %954 = vmatpush1.bf16.msra.mxu0 0
        %955 = vmatprep.subr.bf16.mxu0 0
        %956 = vmatpush1.bf16.msra.mxu0 0
        %957 = vmatprep.subr.bf16.mxu0 0
        %958 = vmatpush1.bf16.msra.mxu0 0
        %959 = vmatprep.subr.bf16.mxu0 0
        %960 = vmatpush1.bf16.msra.mxu0 0
        %961 = vmatprep.subr.bf16.mxu0 0
        %962 = vmatpush1.bf16.msra.mxu0 0
        %963 = vmatprep.subr.bf16.mxu0 0
        %964 = vmatpush1.bf16.msra.mxu0 0
        %965 = vmatprep.subr.bf16.mxu0 0
        %966 = vmatpush1.bf16.msra.mxu0 %v946
        %967 = vmatprep.subr.bf16.mxu0 0
        %968 = vmatpush1.bf16.msra.mxu0 %v945
        %969 = vmatprep.subr.bf16.mxu0 0
        %970 = vmatpush2.bf16.msra.mxu0 0
        %971 = vmatprep.subr.bf16.mxu0 0
        %972 = vmatpush2.bf16.msra.mxu0 0
        %973 = vmatprep.subr.bf16.mxu0 0
        %974 = vmatpush2.bf16.msra.mxu0 0
        %975 = vmatprep.subr.bf16.mxu0 0
        %976 = vmatpush2.bf16.msra.mxu0 0
        %977 = vmatprep.subr.bf16.mxu0 0
        %978 = vmatpush2.bf16.msra.mxu0 0
        %979 = vmatprep.subr.bf16.mxu0 0
        %980 = vmatpush2.bf16.msra.mxu0 0
        %981 = vmatprep.subr.bf16.mxu0 0
        %982 = vmatpush2.bf16.msra.mxu0 0
        %983 = vmatprep.subr.bf16.mxu0 0
        %984 = vmatpush2.bf16.msra.mxu0 0
        %985 = vmatprep.mubr.bf16.mxu0 0
        %986 = vmatmul.mubr.bf16.gmra.mxu0 %v951
        %v987 = vpop.f32.mrf.mxu0
        %v988 = vadd.f32 %v935, %v987
        %v989 = vpop.f32.mrf.mxu0
        %v990 = vpop.f32.mrf.mxu0
        %v991 = vadd.f32 %v935, %v990
        %v992 = vpop.f32.mrf.mxu0
        %993 = vdwg.mxu0
        %v994 = vmax.f32 %v988, 0.0
        %v995 = vmax.f32 %v991, 0.0
        %v996 = vpack.c.bf16 %v995, %v994
        %v998 = vunpack.c.l.b16 %v996
        %v999 = vunpack.c.h.b16 %v996
        %v1000 = vpack.c.b16 %v998, %v998
        %v1001 = vpack.c.b16 %v999, %v999
        %1004 = vst [vmem:[%s402] sm:$0xf] %v1000
        %1005 = vst [vmem:[%s402 + $0x4] sm:$0xf] %v1001
        %s1006 = sand.u32 %s258, 1
        %s1007 = scalar_lea.sflag [#allocation3], %s1006
        %s1008 = sand.u32 %s258, 1
        %s1009 = smul.addr %s1008, 8
        %s1010 = scalar_lea.vmem [#allocation2], %s1009
        // Predicated region
        $region57: #{tpu_custom_call.1} parent=55 // pred_check
          %p1011 = pneg %p268
        $region58: #{tpu_custom_call.1} parent=55 // pred_check_branch
          %1013 = sbr.rel (%p1011) target = $region60
        $region59: #{tpu_custom_call.1} parent=55 // pred_region
          %s1014 = smul.u32 2, %s28
          %s1016 = ssub.s32 128, 128
          %1017 = vsyncadd %s1007, %s1016
          %s1018 = smul.addr %s27, 2
          %s1019 = sadd.s32 %s1014, %s1018
          %s1020 = smul.addr %s1019, 64
          %s1021 = scalar_lea.hbm %s9, %s1020
          %s1022 = sshll.u32 %s1010, 4
          %s1023 = int_to_ptr.vmem [resolvable:$true] %s1022
          %1028 = dma.vmem_to_hbm [thread:$0]  %s1023, 128, %s1021, %s1007, 64, 64, 4
        $region60: #{tpu_custom_call.1} parent=55 // pred_fallthru
          _
      $region56: #{tpu_custom_call.1} parent=5 // pred_fallthru
        _
      %p1029 = scmp.le.s32.totalorder 2, %s18
      // Predicated region
      $region61: #{tpu_custom_call.1} parent=5 // pred_check
        %p1030 = pneg %p1029
      $region62: #{tpu_custom_call.1} parent=5 // pred_check_branch
        %1032 = sbr.rel (%p1030) target = $region64
      $region63: #{tpu_custom_call.1} parent=5 // pred_region
        %s1033 = ssub.s32 %s18, 2
        // Predicated region
        $region65: #{tpu_custom_call.1} parent=63 // pred_check
          %p1034 = pneg %p274
        $region66: #{tpu_custom_call.1} parent=63 // pred_check_branch
          %1036 = sbr.rel (%p1034) target = $region68
        $region67: #{tpu_custom_call.1} parent=63 // pred_region
          %s1037 = sand.u32 %s259, 1
          %s1038 = scalar_lea.sflag [#allocation3], %s1037
          %s1039 = sand.u32 %s259, 1
          %s1040 = smul.addr %s1039, 8
          %s1041 = scalar_lea.vmem [#allocation2], %s1040
          %1042 = dma.done %s1038, 128
        $region68: #{tpu_custom_call.1} parent=63 // pred_fallthru
          _
      $region64: #{tpu_custom_call.1} parent=5 // pred_fallthru
        _
    $region6: #{tpu_custom_call.1} parent=1 // loop_footer
      %s22 = sadd.s32 1, %s18
    $region7: #{tpu_custom_call.1} parent=1 // loop_footer_branch
      %17 = sbr.rel target = $region3
    $region8: #{tpu_custom_call.1} parent=1 // loop_exit
      _
    %1043 = vsyncpa [#allocation3], 1
    %s1044 = scalar_lea.sflag [#allocation3], 1
    %1045 = vsyncpa %s1044, 1

</llo_original>
